<compile_context>
chip_gen: v7x
topology: tpu7x:2x2x1
jax: 0.10.0
libtpu: 0.0.40
codegen_flags: <defaults>
</compile_context>

<pallas_src>
import functools

import jax
import jax.numpy as jnp
from jax.experimental import pallas as pl
from jax.experimental.pallas import tpu as pltpu

LEAKY_SLOPE = 0.01   # nn.LeakyReLU default
LN_EPS = 1e-5        # nn.LayerNorm default

# Budget for the double-buffered input block (bytes).  Conservative vs. the
# 16/32 MiB scoped-VMEM defaults so we never need vmem_limit_bytes overrides.
_VMEM_INPUT_BUDGET = 8 * 1024 * 1024


def _leaky_relu(x):
    return jnp.where(x >= 0, x, LEAKY_SLOPE * x)


def color_decoder_kernel(x_ref,               # [TN, C] full-width input rows
                         w1_ref, b1_ref,      # [D, H], [1, H]  (LN1 affine folded in)
                         w2_ref, b2_ref,      # [H, 3], [1, 3]  (LN2 affine folded in)
                         o_ref,               # [TN, 3]
                         *, model_offset, model_dim):
    x = x_ref[...].astype(jnp.float32)
    # Static in-VMEM column slice instead of a wrapper-side HBM slice copy.
    xs = x[:, model_offset:model_offset + model_dim]          # [TN, D]

    # --- LayerNorm(D) -> Linear(D, D//2) -> LeakyReLU  (affine folded into w1/b1)
    mu1 = jnp.mean(xs, axis=-1, keepdims=True)                 # [TN, 1]
    xc = xs - mu1
    var1 = jnp.mean(xc * xc, axis=-1, keepdims=True)           # biased var (PyTorch LN)
    rstd1 = jax.lax.rsqrt(var1 + LN_EPS)                       # [TN, 1]  (EUP)
    # ((xc * rstd1) @ W) == rstd1 * (xc @ W): apply the per-row scale after the
    # matmul so the elementwise pass runs over H = D/2 lanes instead of D.
    h = jnp.dot(xc, w1_ref[...], preferred_element_type=jnp.float32)
    h = _leaky_relu(h * rstd1 + b1_ref[...])                   # [TN, H]

    # --- LayerNorm(D//2) -> Linear(D//2, 3) -> LeakyReLU
    mu2 = jnp.mean(h, axis=-1, keepdims=True)
    hc = h - mu2
    var2 = jnp.mean(hc * hc, axis=-1, keepdims=True)
    rstd2 = jax.lax.rsqrt(var2 + LN_EPS)
    y = jnp.dot(hc, w2_ref[...], preferred_element_type=jnp.float32)
    y = _leaky_relu(y * rstd2 + b2_ref[...])                   # [TN, 3]

    # out = sigmoid(xs[:, 0:3] + mlp(xs))
    o_ref[...] = jax.nn.sigmoid(xs[:, 0:3] + y).astype(o_ref.dtype)


def _round_up(n, m):
    return pl.cdiv(n, m) * m


@functools.partial(jax.jit, static_argnames=("model_offset", "model_dim", "tile_n"))
def color_decoder(x, params, *, model_offset, model_dim, tile_n=4096):
    """x: [N, C] (f32 or bf16), C >= model_offset + model_dim. Returns [N, 3] f32."""
    N, C = x.shape
    D = model_dim
    H = D // 2
    assert C >= model_offset + model_dim

    g1, b1, w1, bb1, g2, b2, w2, bb2 = params
    # Fold the LayerNorm affines into the following Linear (trace-time only):
    #   (xhat * g + b) @ W + bb  ==  xhat @ (g[:, None] * W) + (b @ W + bb)
    w1f = (g1[:, None] * w1).astype(jnp.float32)
    b1f = (b1 @ w1 + bb1).reshape(1, H).astype(jnp.float32)
    w2f = (g2[:, None] * w2).astype(jnp.float32)
    b2f = (b2 @ w2 + bb2).reshape(1, 3).astype(jnp.float32)

    # Tile sizing: as large as possible while the double-buffered input block
    # (2 * tn * C * itemsize) stays within the VMEM budget.
    itemsize = jnp.dtype(x.dtype).itemsize
    max_tn = max(8, (_VMEM_INPUT_BUDGET // (2 * C * itemsize)) // 8 * 8)
    tn = max(8, min(tile_n, max_tn, _round_up(N, 8)))
    # Megacore (v7x): keep >= 2 "parallel" grid steps when N is large enough
    # that splitting does not shrink tiles below a useful size.
    if N // tn < 2 and N >= 2048:
        tn = min(tn, _round_up(pl.cdiv(N, 2), 8))
    n_pad = _round_up(N, tn)
    if n_pad != N:
        # Ragged N: zero-pad to a whole number of tiles (padded rows are
        # computed and discarded; no NaNs since LN uses var + eps).
        x = jnp.pad(x, ((0, n_pad - N), (0, 0)))

    grid = (n_pad // tn,)
    kernel = functools.partial(color_decoder_kernel,
                               model_offset=model_offset, model_dim=model_dim)
    full = lambda i: (0, 0)   # parameters: same (only) block every grid step

    out = pl.pallas_call(
        kernel,
        out_shape=jax.ShapeDtypeStruct((n_pad, 3), jnp.float32),
        grid_spec=pltpu.PrefetchScalarGridSpec(
            num_scalar_prefetch=0,
            grid=grid,
            in_specs=[
                pl.BlockSpec((tn, C), lambda i: (i, 0)),   # rows of x, full width
                pl.BlockSpec((D, H), full), pl.BlockSpec((1, H), full),
                pl.BlockSpec((H, 3), full), pl.BlockSpec((1, 3), full),
            ],
            out_specs=pl.BlockSpec((tn, 3), lambda i: (i, 0)),
        ),
        compiler_params=pltpu.CompilerParams(
            dimension_semantics=("parallel",)),
    )(x, w1f, b1f, w2f, b2f)

    return out[:N]


def init_params(key, model_dim):
    """Deterministic synthetic parameters (shapes follow the PyTorch module)."""
    D = model_dim
    H = D // 2
    ks = jax.random.split(key, 8)
    # LayerNorm(D)
    g1 = 1.0 + 0.1 * jax.random.normal(ks[0], (D,), jnp.float32)
    b1 = 0.1 * jax.random.normal(ks[1], (D,), jnp.float32)
    # Linear(D, D//2): torch stores [H, D]; we keep the transposed [D, H].
    w1 = jax.random.normal(ks[2], (D, H), jnp.float32) / jnp.sqrt(D)
    bb1 = 0.1 * jax.random.normal(ks[3], (H,), jnp.float32)
    # LayerNorm(D//2)
    g2 = 1.0 + 0.1 * jax.random.normal(ks[4], (H,), jnp.float32)
    b2 = 0.1 * jax.random.normal(ks[5], (H,), jnp.float32)
    # Linear(D//2, 3): torch stores [3, H]; we keep the transposed [H, 3].
    w2 = jax.random.normal(ks[6], (H, 3), jnp.float32) / jnp.sqrt(H)
    bb2 = 0.1 * jax.random.normal(ks[7], (3,), jnp.float32)
    return (g1, b1, w1, bb1, g2, b2, w2, bb2)


def reference(x, params, *, model_offset, model_dim):
    """Pure-JAX reference mirroring the PyTorch forward (un-folded params)."""
    g1, b1, w1, bb1, g2, b2, w2, bb2 = params
    xs = x[:, model_offset:model_offset + model_dim].astype(jnp.float32)

    def ln(v):
        mu = jnp.mean(v, axis=-1, keepdims=True)
        var = jnp.mean((v - mu) ** 2, axis=-1, keepdims=True)
        return (v - mu) * jax.lax.rsqrt(var + LN_EPS)

    h = ln(xs) * g1 + b1
    h = _leaky_relu(h @ w1 + bb1)
    h = ln(h) * g2 + b2
    h = _leaky_relu(h @ w2 + bb2)
    return jax.nn.sigmoid(xs[:, 0:3] + h)


if __name__ == "__main__":
    key = jax.random.PRNGKey(0)
    k_x, k_p = jax.random.split(key)

    MODEL_OFFSET = 4
    MODEL_DIM = 32
    N = 300                               # ragged: exercises the padding path
    C = MODEL_OFFSET + MODEL_DIM + 8      # extra channels beyond the slice

    x = jax.random.normal(k_x, (N, C), jnp.float32)
    params = init_params(k_p, MODEL_DIM)

    out = color_decoder(x, params, model_offset=MODEL_OFFSET,
                        model_dim=MODEL_DIM, tile_n=128)   # small tile for the demo
    out = jax.block_until_ready(out)

    ref = reference(x, params, model_offset=MODEL_OFFSET, model_dim=MODEL_DIM)
    assert out.shape == (N, 3)
    assert jnp.allclose(out, ref, atol=2e-5, rtol=2e-5), "mismatch vs reference"

    print("KERNEL_OK")
</pallas_src>

<mosaic_0001>
module attributes {stable_mosaic.version = 11 : i64} {
  func.func @color_decoder_kernel(%arg0: i32, %arg1: memref<128x44xf32, #tpu.memory_space<vmem>>, %arg2: memref<32x16xf32, #tpu.memory_space<vmem>>, %arg3: memref<1x16xf32, #tpu.memory_space<vmem>>, %arg4: memref<16x3xf32, #tpu.memory_space<vmem>>, %arg5: memref<1x3xf32, #tpu.memory_space<vmem>>, %arg6: memref<128x3xf32, #tpu.memory_space<vmem>>) attributes {dimension_semantics = [#tpu.dimension_semantics<parallel>], iteration_bounds = array<i64: 3>, scalar_prefetch = 0 : i64, scratch_operands = 0 : i64, tpu.core_type = #tpu.core_type<tc>, window_params = [{transform_indices = @transform_0, window_bounds = array<i64: 128, 44>}, {pipeline_mode = #tpu.pipeline_mode<synchronous>, transform_indices = @transform_1, window_bounds = array<i64: 32, 16>}, {pipeline_mode = #tpu.pipeline_mode<synchronous>, transform_indices = @transform_2, window_bounds = array<i64: 1, 16>}, {pipeline_mode = #tpu.pipeline_mode<synchronous>, transform_indices = @transform_3, window_bounds = array<i64: 16, 3>}, {pipeline_mode = #tpu.pipeline_mode<synchronous>, transform_indices = @transform_4, window_bounds = array<i64: 1, 3>}, {transform_indices = @transform_5, window_bounds = array<i64: 128, 3>}]} {
    %c0 = arith.constant 0 : index
    %c0_0 = arith.constant 0 : index
    %0 = vector.load %arg1[%c0, %c0_0] : memref<128x44xf32, #tpu.memory_space<vmem>>, vector<128x44xf32>
    %1 = vector.extract_strided_slice %0 {offsets = [0, 4], sizes = [128, 32], strides = [1, 1]} : vector<128x44xf32> to vector<128x32xf32>
    %cst = arith.constant dense<0.000000e+00> : vector<128xf32>
    %2 = vector.multi_reduction <add>, %1, %cst [1] : vector<128x32xf32> to vector<128xf32>
    %3 = vector.shape_cast %2 : vector<128xf32> to vector<128x1xf32>
    %cst_1 = arith.constant 3.200000e+01 : f32
    %4 = vector.broadcast %cst_1 : f32 to vector<128x1xf32>
    %5 = arith.divf %3, %4 : vector<128x1xf32>
    %6 = vector.broadcast %5 : vector<128x1xf32> to vector<128x32xf32>
    %7 = arith.subf %1, %6 : vector<128x32xf32>
    %8 = arith.mulf %7, %7 : vector<128x32xf32>
    %cst_2 = arith.constant dense<0.000000e+00> : vector<128xf32>
    %9 = vector.multi_reduction <add>, %8, %cst_2 [1] : vector<128x32xf32> to vector<128xf32>
    %10 = vector.shape_cast %9 : vector<128xf32> to vector<128x1xf32>
    %cst_3 = arith.constant 3.200000e+01 : f32
    %11 = vector.broadcast %cst_3 : f32 to vector<128x1xf32>
    %12 = arith.divf %10, %11 : vector<128x1xf32>
    %cst_4 = arith.constant 9.99999974E-6 : f32
    %13 = vector.broadcast %cst_4 : f32 to vector<128x1xf32>
    %14 = arith.addf %12, %13 : vector<128x1xf32>
    %15 = math.rsqrt %14 : vector<128x1xf32>
    %c0_5 = arith.constant 0 : index
    %c0_6 = arith.constant 0 : index
    %16 = vector.load %arg2[%c0_5, %c0_6] : memref<32x16xf32, #tpu.memory_space<vmem>>, vector<32x16xf32>
    %cst_7 = arith.constant dense<0.000000e+00> : vector<128x16xf32>
    %17 = tpu.matmul %7, %16, %cst_7 {dimension_numbers = #tpu.dot_dimension_numbers<[1], [0], [0], [1], [0, 0, 1, 1], [], []>} : vector<128x32xf32>, vector<32x16xf32>, vector<128x16xf32> -> vector<128x16xf32>
    %18 = vector.broadcast %15 : vector<128x1xf32> to vector<128x16xf32>
    %19 = arith.mulf %17, %18 : vector<128x16xf32>
    %c0_8 = arith.constant 0 : index
    %c0_9 = arith.constant 0 : index
    %20 = vector.load %arg3[%c0_8, %c0_9] : memref<1x16xf32, #tpu.memory_space<vmem>>, vector<1x16xf32>
    %21 = vector.broadcast %20 : vector<1x16xf32> to vector<128x16xf32>
    %22 = arith.addf %19, %21 : vector<128x16xf32>
    %cst_10 = arith.constant 0.000000e+00 : f32
    %23 = vector.broadcast %cst_10 : f32 to vector<128x16xf32>
    %24 = arith.cmpf oge, %22, %23 : vector<128x16xf32>
    %cst_11 = arith.constant 0.00999999977 : f32
    %25 = vector.broadcast %cst_11 : f32 to vector<128x16xf32>
    %26 = arith.mulf %25, %22 : vector<128x16xf32>
    %27 = arith.select %24, %22, %26 : vector<128x16xi1>, vector<128x16xf32>
    %cst_12 = arith.constant dense<0.000000e+00> : vector<128xf32>
    %28 = vector.multi_reduction <add>, %27, %cst_12 [1] : vector<128x16xf32> to vector<128xf32>
    %29 = vector.shape_cast %28 : vector<128xf32> to vector<128x1xf32>
    %cst_13 = arith.constant 1.600000e+01 : f32
    %30 = vector.broadcast %cst_13 : f32 to vector<128x1xf32>
    %31 = arith.divf %29, %30 : vector<128x1xf32>
    %32 = vector.broadcast %31 : vector<128x1xf32> to vector<128x16xf32>
    %33 = arith.subf %27, %32 : vector<128x16xf32>
    %34 = arith.mulf %33, %33 : vector<128x16xf32>
    %cst_14 = arith.constant dense<0.000000e+00> : vector<128xf32>
    %35 = vector.multi_reduction <add>, %34, %cst_14 [1] : vector<128x16xf32> to vector<128xf32>
    %36 = vector.shape_cast %35 : vector<128xf32> to vector<128x1xf32>
    %cst_15 = arith.constant 1.600000e+01 : f32
    %37 = vector.broadcast %cst_15 : f32 to vector<128x1xf32>
    %38 = arith.divf %36, %37 : vector<128x1xf32>
    %cst_16 = arith.constant 9.99999974E-6 : f32
    %39 = vector.broadcast %cst_16 : f32 to vector<128x1xf32>
    %40 = arith.addf %38, %39 : vector<128x1xf32>
    %41 = math.rsqrt %40 : vector<128x1xf32>
    %c0_17 = arith.constant 0 : index
    %c0_18 = arith.constant 0 : index
    %42 = vector.load %arg4[%c0_17, %c0_18] : memref<16x3xf32, #tpu.memory_space<vmem>>, vector<16x3xf32>
    %cst_19 = arith.constant dense<0.000000e+00> : vector<128x3xf32>
    %43 = tpu.matmul %33, %42, %cst_19 {dimension_numbers = #tpu.dot_dimension_numbers<[1], [0], [0], [1], [0, 0, 1, 1], [], []>} : vector<128x16xf32>, vector<16x3xf32>, vector<128x3xf32> -> vector<128x3xf32>
    %44 = vector.broadcast %41 : vector<128x1xf32> to vector<128x3xf32>
    %45 = arith.mulf %43, %44 : vector<128x3xf32>
    %c0_20 = arith.constant 0 : index
    %c0_21 = arith.constant 0 : index
    %46 = vector.load %arg5[%c0_20, %c0_21] : memref<1x3xf32, #tpu.memory_space<vmem>>, vector<1x3xf32>
    %47 = vector.broadcast %46 : vector<1x3xf32> to vector<128x3xf32>
    %48 = arith.addf %45, %47 : vector<128x3xf32>
    %cst_22 = arith.constant 0.000000e+00 : f32
    %49 = vector.broadcast %cst_22 : f32 to vector<128x3xf32>
    %50 = arith.cmpf oge, %48, %49 : vector<128x3xf32>
    %cst_23 = arith.constant 0.00999999977 : f32
    %51 = vector.broadcast %cst_23 : f32 to vector<128x3xf32>
    %52 = arith.mulf %51, %48 : vector<128x3xf32>
    %53 = arith.select %50, %48, %52 : vector<128x3xi1>, vector<128x3xf32>
    %54 = vector.extract_strided_slice %1 {offsets = [0, 0], sizes = [128, 3], strides = [1, 1]} : vector<128x32xf32> to vector<128x3xf32>
    %55 = arith.addf %54, %53 : vector<128x3xf32>
    %56 = arith.negf %55 : vector<128x3xf32>
    %57 = math.exp %56 : vector<128x3xf32>
    %cst_24 = arith.constant 1.000000e+00 : f32
    %58 = vector.broadcast %cst_24 : f32 to vector<128x3xf32>
    %59 = arith.addf %58, %57 : vector<128x3xf32>
    %60 = arith.divf %58, %59 : vector<128x3xf32>
    %c0_25 = arith.constant 0 : index
    %c0_26 = arith.constant 0 : index
    %61 = vector.load %arg6[%c0_25, %c0_26] : memref<128x3xf32, #tpu.memory_space<vmem>>, vector<128x3xf32>
    tpu.vector_store %arg6[%c0_25, %c0_26], %60 {strides = array<i32>} : memref<128x3xf32, #tpu.memory_space<vmem>>, vector<128x3xf32>,
    return
  }
  func.func @transform_0(%arg0: i32) -> (i32, i32) {
    %c0_i32 = arith.constant 0 : i32
    %c0_i32_0 = arith.constant 0 : i32
    return %arg0, %c0_i32 : i32, i32
  }
  func.func @transform_1(%arg0: i32) -> (i32, i32) {
    %c0_i32 = arith.constant 0 : i32
    %c0_i32_0 = arith.constant 0 : i32
    %c0_i32_1 = arith.constant 0 : i32
    return %c0_i32, %c0_i32_0 : i32, i32
  }
  func.func @transform_2(%arg0: i32) -> (i32, i32) {
    %c0_i32 = arith.constant 0 : i32
    %c0_i32_0 = arith.constant 0 : i32
    %c0_i32_1 = arith.constant 0 : i32
    return %c0_i32, %c0_i32_0 : i32, i32
  }
  func.func @transform_3(%arg0: i32) -> (i32, i32) {
    %c0_i32 = arith.constant 0 : i32
    %c0_i32_0 = arith.constant 0 : i32
    %c0_i32_1 = arith.constant 0 : i32
    return %c0_i32, %c0_i32_0 : i32, i32
  }
  func.func @transform_4(%arg0: i32) -> (i32, i32) {
    %c0_i32 = arith.constant 0 : i32
    %c0_i32_0 = arith.constant 0 : i32
    %c0_i32_1 = arith.constant 0 : i32
    return %c0_i32, %c0_i32_0 : i32, i32
  }
  func.func @transform_5(%arg0: i32) -> (i32, i32) {
    %c0_i32 = arith.constant 0 : i32
    %c0_i32_0 = arith.constant 0 : i32
    return %arg0, %c0_i32 : i32, i32
  }
}

</mosaic_0001>

<llo_original>
// kernel: color_decoder.1
$region0: #{color_decoder.1}
  #allocation0 [shape = 'u32[]', space=smem, size = 0x4, offset = 0x4, fixed_abs, tag = 'smem constant byte address 0x4 - core index']
  #allocation1 [shape = 'u32[144,128]{1,0:T(1,128)}', space=vmem, size = 0x12000, scoped, tag = 'internal scratch']
  %s0 = inlined_call_operand.vmem [shape: f32[384,44], index: 0, kind: input, shape index: {}]
  %s1 = inlined_call_operand.vmem [shape: f32[32,16], index: 1, kind: input, shape index: {}]
  %s2 = inlined_call_operand.vmem [shape: f32[1,16], index: 2, kind: input, shape index: {}]
  %s3 = inlined_call_operand.vmem [shape: f32[16,3], index: 3, kind: input, shape index: {}]
  %s4 = inlined_call_operand.vmem [shape: f32[1,3], index: 4, kind: input, shape index: {}]
  %s5 = inlined_call_operand.vmem [shape: f32[384,3], index: 5, kind: output, shape index: {}]
  %s6 = sld [smem:[#allocation0]]
  $region53: #{color_decoder.1} parent=0
    _
  %s8 = ssub.s32 1, %s6
  %s9 = scalar_select 0, %s8, %s6
  loop: start=0, step=1, limit=5
  $region2: #{color_decoder.1} parent=0 // loop_pre_header
    _
  $region3: #{color_decoder.1} parent=0 // loop_header
    %s11 = sphi 0, %s15
    %p12 = scmp.ge.s32.totalorder %s11, 5
    %s21 = sphi 0, %s23
    %s24 = sphi 0, %s21
    %s25 = sphi 0, %s24
    %s41 = sphi 0, %s25
    %s45 = sphi 0, %s45
    %s47 = sphi 0, %s45
    %s48 = sphi 0, %s47
    %s62 = sphi 0, %s48
    %s66 = sphi 0, %s66
    %s68 = sphi 0, %s66
    %s69 = sphi 0, %s68
    %s83 = sphi 0, %s69
    %s87 = sphi 0, %s87
    %s89 = sphi 0, %s87
    %s90 = sphi 0, %s89
    %s104 = sphi 0, %s90
    %s108 = sphi 0, %s108
    %s110 = sphi 0, %s108
    %s111 = sphi 0, %s110
    %s125 = sphi 0, %s111
    %s131 = sphi 0, %s133
    %s134 = sphi 0, %s131
    %s135 = sphi 0, %s134
    %s151 = sphi 0, %s135
  $region4: #{color_decoder.1} parent=0 // loop_header_branch
    %14 = sbr.rel (%p12) target = $region8
  $region5: #{color_decoder.1} parent=0 // loop_body
    %s16 = ssub.s32 %s11, 1
    %s17 = ssub.s32 %s11, 2
    %s18 = sadd.s32 %s11, 1
    %s19 = ssub.s32 %s11, %s18
    %p20 = scmp.eq.s32.totalorder %s19, 0
    %s22 = sadd.s32 %s21, 1
    %s23 = scalar_select %p20, %s21, %s22
    %p26 = pneg %p20
    %p27 = scmp.eq.s32.totalorder %s11, 2
    %p28 = por %p26, %p27
    %p29 = scmp.ne.s32.totalorder %s21, %s24
    %p30 = scmp.eq.s32.totalorder %s11, 0
    %p31 = por %p29, %p30
    %p32 = scmp.ne.s32.totalorder %s21, %s24
    %p33 = scmp.eq.s32.totalorder %s16, 2
    %p34 = por %p32, %p33
    %p35 = scmp.ne.s32.totalorder %s24, %s25
    %p36 = scmp.eq.s32.totalorder %s16, 0
    %p37 = por %p35, %p36
    %p38 = scmp.ne.s32.totalorder %s24, %s25
    %p39 = scmp.eq.s32.totalorder %s17, 2
    %p40 = por %p38, %p39
    %p42 = scmp.ne.s32.totalorder %s25, %s41
    %p43 = scmp.eq.s32.totalorder %s17, 0
    %p44 = por %p42, %p43
    %s46 = sadd.s32 %s45, 1
    %p49 = scmp.eq.s32.totalorder %s11, 2
    %p50 = scmp.ne.s32.totalorder %s45, %s47
    %p51 = scmp.eq.s32.totalorder %s11, 0
    %p52 = por %p50, %p51
    %p53 = scmp.ne.s32.totalorder %s45, %s47
    %p54 = scmp.eq.s32.totalorder %s16, 2
    %p55 = por %p53, %p54
    %p56 = scmp.ne.s32.totalorder %s47, %s48
    %p57 = scmp.eq.s32.totalorder %s16, 0
    %p58 = por %p56, %p57
    %p59 = scmp.ne.s32.totalorder %s47, %s48
    %p60 = scmp.eq.s32.totalorder %s17, 2
    %p61 = por %p59, %p60
    %p63 = scmp.ne.s32.totalorder %s48, %s62
    %p64 = scmp.eq.s32.totalorder %s17, 0
    %p65 = por %p63, %p64
    %s67 = sadd.s32 %s66, 1
    %p70 = scmp.eq.s32.totalorder %s11, 2
    %p71 = scmp.ne.s32.totalorder %s66, %s68
    %p72 = scmp.eq.s32.totalorder %s11, 0
    %p73 = por %p71, %p72
    %p74 = scmp.ne.s32.totalorder %s66, %s68
    %p75 = scmp.eq.s32.totalorder %s16, 2
    %p76 = por %p74, %p75
    %p77 = scmp.ne.s32.totalorder %s68, %s69
    %p78 = scmp.eq.s32.totalorder %s16, 0
    %p79 = por %p77, %p78
    %p80 = scmp.ne.s32.totalorder %s68, %s69
    %p81 = scmp.eq.s32.totalorder %s17, 2
    %p82 = por %p80, %p81
    %p84 = scmp.ne.s32.totalorder %s69, %s83
    %p85 = scmp.eq.s32.totalorder %s17, 0
    %p86 = por %p84, %p85
    %s88 = sadd.s32 %s87, 1
    %p91 = scmp.eq.s32.totalorder %s11, 2
    %p92 = scmp.ne.s32.totalorder %s87, %s89
    %p93 = scmp.eq.s32.totalorder %s11, 0
    %p94 = por %p92, %p93
    %p95 = scmp.ne.s32.totalorder %s87, %s89
    %p96 = scmp.eq.s32.totalorder %s16, 2
    %p97 = por %p95, %p96
    %p98 = scmp.ne.s32.totalorder %s89, %s90
    %p99 = scmp.eq.s32.totalorder %s16, 0
    %p100 = por %p98, %p99
    %p101 = scmp.ne.s32.totalorder %s89, %s90
    %p102 = scmp.eq.s32.totalorder %s17, 2
    %p103 = por %p101, %p102
    %p105 = scmp.ne.s32.totalorder %s90, %s104
    %p106 = scmp.eq.s32.totalorder %s17, 0
    %p107 = por %p105, %p106
    %s109 = sadd.s32 %s108, 1
    %p112 = scmp.eq.s32.totalorder %s11, 2
    %p113 = scmp.ne.s32.totalorder %s108, %s110
    %p114 = scmp.eq.s32.totalorder %s11, 0
    %p115 = por %p113, %p114
    %p116 = scmp.ne.s32.totalorder %s108, %s110
    %p117 = scmp.eq.s32.totalorder %s16, 2
    %p118 = por %p116, %p117
    %p119 = scmp.ne.s32.totalorder %s110, %s111
    %p120 = scmp.eq.s32.totalorder %s16, 0
    %p121 = por %p119, %p120
    %p122 = scmp.ne.s32.totalorder %s110, %s111
    %p123 = scmp.eq.s32.totalorder %s17, 2
    %p124 = por %p122, %p123
    %p126 = scmp.ne.s32.totalorder %s111, %s125
    %p127 = scmp.eq.s32.totalorder %s17, 0
    %p128 = por %p126, %p127
    %s129 = ssub.s32 %s11, %s18
    %p130 = scmp.eq.s32.totalorder %s129, 0
    %s132 = sadd.s32 %s131, 1
    %s133 = scalar_select %p130, %s131, %s132
    %p136 = pneg %p130
    %p137 = scmp.eq.s32.totalorder %s11, 2
    %p138 = por %p136, %p137
    %p139 = scmp.ne.s32.totalorder %s131, %s134
    %p140 = scmp.eq.s32.totalorder %s11, 0
    %p141 = por %p139, %p140
    %p142 = scmp.ne.s32.totalorder %s131, %s134
    %p143 = scmp.eq.s32.totalorder %s16, 2
    %p144 = por %p142, %p143
    %p145 = scmp.ne.s32.totalorder %s134, %s135
    %p146 = scmp.eq.s32.totalorder %s16, 0
    %p147 = por %p145, %p146
    %p148 = scmp.ne.s32.totalorder %s134, %s135
    %p149 = scmp.eq.s32.totalorder %s17, 2
    %p150 = por %p148, %p149
    %p152 = scmp.ne.s32.totalorder %s135, %s151
    %p153 = scmp.eq.s32.totalorder %s17, 0
    %p154 = por %p152, %p153
    %p155 = scmp.le.s32.totalorder 1, %s11
    %p156 = scmp.lt.s32.totalorder %s11, 4
    %p157 = pnand %p155, %p156
    %p158 = pneg %p157
    // Predicated region
    $region9: #{color_decoder.1} parent=5 // pred_check
      _
    $region10: #{color_decoder.1} parent=5 // pred_check_branch
      %160 = sbr.rel (%p157) target = $region12
    $region11: #{color_decoder.1} parent=5 // pred_region
      %s161 = ssub.s32 %s11, 1
      // Predicated region
      $region13: #{color_decoder.1} parent=11 // pred_check
        %p162 = pneg %p58
      $region14: #{color_decoder.1} parent=11 // pred_check_branch
        %164 = sbr.rel (%p162) target = $region16
      $region15: #{color_decoder.1} parent=11 // pred_region
        _
      $region16: #{color_decoder.1} parent=11 // pred_fallthru
        _
      // Predicated region
      $region17: #{color_decoder.1} parent=11 // pred_check
        %p165 = pneg %p79
      $region18: #{color_decoder.1} parent=11 // pred_check_branch
        %167 = sbr.rel (%p165) target = $region20
      $region19: #{color_decoder.1} parent=11 // pred_region
        _
      $region20: #{color_decoder.1} parent=11 // pred_fallthru
        _
      // Predicated region
      $region21: #{color_decoder.1} parent=11 // pred_check
        %p168 = pneg %p100
      $region22: #{color_decoder.1} parent=11 // pred_check_branch
        %170 = sbr.rel (%p168) target = $region24
      $region23: #{color_decoder.1} parent=11 // pred_region
        _
      $region24: #{color_decoder.1} parent=11 // pred_fallthru
        _
      // Predicated region
      $region25: #{color_decoder.1} parent=11 // pred_check
        %p171 = pneg %p121
      $region26: #{color_decoder.1} parent=11 // pred_check_branch
        %173 = sbr.rel (%p171) target = $region28
      $region27: #{color_decoder.1} parent=11 // pred_region
        _
      $region28: #{color_decoder.1} parent=11 // pred_fallthru
        _
    $region12: #{color_decoder.1} parent=5 // pred_fallthru
      _
    %p174 = scmp.lt.s32.totalorder %s11, 3
    // Predicated region
    $region29: #{color_decoder.1} parent=5 // pred_check
      %p175 = pneg %p174
    $region30: #{color_decoder.1} parent=5 // pred_check_branch
      %177 = sbr.rel (%p175) target = $region32
    $region31: #{color_decoder.1} parent=5 // pred_region
      // Predicated region
      $region33: #{color_decoder.1} parent=31 // pred_check
        %p178 = pneg %p31
      $region34: #{color_decoder.1} parent=31 // pred_check_branch
        %180 = sbr.rel (%p178) target = $region36
      $region35: #{color_decoder.1} parent=31 // pred_region
        %s181 = smul.u32 16, %s11
        %p182 = scmp.lt.s32.totalorder %s181, 47
        %s183 = scalar_select %p182, %s181, 47
        %s184 = smul.addr %s183, 8
        %s185 = scalar_lea.vmem %s0, %s184
        %s186 = smul.u32 16, %s11
      $region36: #{color_decoder.1} parent=31 // pred_fallthru
        _
    $region32: #{color_decoder.1} parent=5 // pred_fallthru
      _
    %p187 = scmp.le.s32.totalorder 1, %s11
    %p188 = scmp.lt.s32.totalorder %s11, 4
    %p189 = pnand %p187, %p188
    %p190 = pneg %p189
    // Predicated region
    $region37: #{color_decoder.1} parent=5 // pred_check
      _
    $region38: #{color_decoder.1} parent=5 // pred_check_branch
      %192 = sbr.rel (%p189) target = $region40
    $region39: #{color_decoder.1} parent=5 // pred_region
      %s193 = ssub.s32 %s11, 1
      %s194 = smul.u32 16, %s16
      %p195 = scmp.lt.s32.totalorder %s194, 47
      %s196 = scalar_select %p195, %s194, 47
      %s197 = smul.addr %s196, 8
      %s198 = scalar_lea.vmem %s0, %s197
      %p199 = pneg %p37
      %p200 = pneg %p34
      %p201 = pneg %p58
      %p202 = pneg %p55
      %p203 = pneg %p79
      %p204 = pneg %p76
      %p205 = pneg %p100
      %p206 = pneg %p97
      %p207 = pneg %p121
      %p208 = pneg %p118
      %p209 = pneg %p147
      %p210 = pneg %p144
      %s211 = smul.u32 16, %s16
      %p212 = scmp.lt.s32.totalorder %s211, 47
      %s213 = scalar_select %p212, %s211, 47
      %s214 = smul.addr %s213, 8
      %s215 = scalar_lea.vmem %s5, %s214
      %s216 = smul.u32 16, %s16
      %p217 = scmp.lt.s32.totalorder %s216, 47
      %s218 = scalar_select %p217, %s216, 47
      %s219 = smul.addr %s218, 8
      %s220 = scalar_lea.vmem %s0, %s219
      %s221 = smul.u32 16, %s16
      %s222 = smul.u32 16, %s16
      %p223 = scmp.lt.s32.totalorder %s222, 47
      %s224 = scalar_select %p223, %s222, 47
      %s225 = smul.addr %s224, 8
      %s226 = scalar_lea.vmem %s5, %s225
      %s227 = smul.u32 16, %s16
      %v228 = vld [vmem:[%s220] sm:$0xff]
      %v229 = vld [vmem:[%s220 + $0x8] sm:$0xff]
      %v230 = vld [vmem:[%s220 + $0x10] sm:$0xff]
      %v231 = vld [vmem:[%s220 + $0x18] sm:$0xff]
      %v232 = vld [vmem:[%s220 + $0x20] sm:$0xff]
      %v233 = vld [vmem:[%s220 + $0x28] sm:$0xff]
      %v234 = vld [vmem:[%s220 + $0x30] sm:$0xff]
      %v235 = vld [vmem:[%s220 + $0x38] sm:$0xff]
      %v236 = vld [vmem:[%s220 + $0x40] sm:$0xff]
      %v237 = vld [vmem:[%s220 + $0x48] sm:$0xff]
      %v238 = vld [vmem:[%s220 + $0x50] sm:$0xff]
      %v239 = vld [vmem:[%s220 + $0x58] sm:$0xff]
      %v240 = vld [vmem:[%s220 + $0x60] sm:$0xff]
      %v241 = vld [vmem:[%s220 + $0x68] sm:$0xff]
      %v242 = vld [vmem:[%s220 + $0x70] sm:$0xff]
      %v243 = vld [vmem:[%s220 + $0x78] sm:$0xff]
      %260 = vrot.lane.b32.xlu0 %v228, 124
      %v261 = vpop.permute.xlu0 %260
      %262 = vrot.lane.b32.xlu0 %v229, 124
      %v263 = vpop.permute.xlu0 %262
      %264 = vrot.lane.b32.xlu0 %v230, 124
      %v265 = vpop.permute.xlu0 %264
      %266 = vrot.lane.b32.xlu0 %v231, 124
      %v267 = vpop.permute.xlu0 %266
      %268 = vrot.lane.b32.xlu0 %v232, 124
      %v269 = vpop.permute.xlu0 %268
      %270 = vrot.lane.b32.xlu0 %v233, 124
      %v271 = vpop.permute.xlu0 %270
      %272 = vrot.lane.b32.xlu0 %v234, 124
      %v273 = vpop.permute.xlu0 %272
      %274 = vrot.lane.b32.xlu0 %v235, 124
      %v275 = vpop.permute.xlu0 %274
      %276 = vrot.lane.b32.xlu0 %v236, 124
      %v277 = vpop.permute.xlu0 %276
      %278 = vrot.lane.b32.xlu0 %v237, 124
      %v279 = vpop.permute.xlu0 %278
      %280 = vrot.lane.b32.xlu0 %v238, 124
      %v281 = vpop.permute.xlu0 %280
      %282 = vrot.lane.b32.xlu0 %v239, 124
      %v283 = vpop.permute.xlu0 %282
      %284 = vrot.lane.b32.xlu0 %v240, 124
      %v285 = vpop.permute.xlu0 %284
      %286 = vrot.lane.b32.xlu0 %v241, 124
      %v287 = vpop.permute.xlu0 %286
      %288 = vrot.lane.b32.xlu0 %v242, 124
      %v289 = vpop.permute.xlu0 %288
      %290 = vrot.lane.b32.xlu0 %v243, 124
      %v291 = vpop.permute.xlu0 %290
      %vm308 = vcmask 261120
      %v309 = vsel %vm308, %v261, 0.0
      %310 = vadd.xlane.f32.xlu0 %v309
      %v311 = vpop.xlane.xlu0 %310
      %v312 = vsel %vm308, %v263, 0.0
      %313 = vadd.xlane.f32.xlu0 %v312
      %v314 = vpop.xlane.xlu0 %313
      %v315 = vsel %vm308, %v265, 0.0
      %316 = vadd.xlane.f32.xlu0 %v315
      %v317 = vpop.xlane.xlu0 %316
      %v318 = vsel %vm308, %v267, 0.0
      %319 = vadd.xlane.f32.xlu0 %v318
      %v320 = vpop.xlane.xlu0 %319
      %v321 = vsel %vm308, %v269, 0.0
      %322 = vadd.xlane.f32.xlu0 %v321
      %v323 = vpop.xlane.xlu0 %322
      %v324 = vsel %vm308, %v271, 0.0
      %325 = vadd.xlane.f32.xlu0 %v324
      %v326 = vpop.xlane.xlu0 %325
      %v327 = vsel %vm308, %v273, 0.0
      %328 = vadd.xlane.f32.xlu0 %v327
      %v329 = vpop.xlane.xlu0 %328
      %v330 = vsel %vm308, %v275, 0.0
      %331 = vadd.xlane.f32.xlu0 %v330
      %v332 = vpop.xlane.xlu0 %331
      %v333 = vsel %vm308, %v277, 0.0
      %334 = vadd.xlane.f32.xlu0 %v333
      %v335 = vpop.xlane.xlu0 %334
      %v336 = vsel %vm308, %v279, 0.0
      %337 = vadd.xlane.f32.xlu0 %v336
      %v338 = vpop.xlane.xlu0 %337
      %v339 = vsel %vm308, %v281, 0.0
      %340 = vadd.xlane.f32.xlu0 %v339
      %v341 = vpop.xlane.xlu0 %340
      %v342 = vsel %vm308, %v283, 0.0
      %343 = vadd.xlane.f32.xlu0 %v342
      %v344 = vpop.xlane.xlu0 %343
      %v345 = vsel %vm308, %v285, 0.0
      %346 = vadd.xlane.f32.xlu0 %v345
      %v347 = vpop.xlane.xlu0 %346
      %v348 = vsel %vm308, %v287, 0.0
      %349 = vadd.xlane.f32.xlu0 %v348
      %v350 = vpop.xlane.xlu0 %349
      %v351 = vsel %vm308, %v289, 0.0
      %352 = vadd.xlane.f32.xlu0 %v351
      %v353 = vpop.xlane.xlu0 %352
      %v354 = vsel %vm308, %v291, 0.0
      %355 = vadd.xlane.f32.xlu0 %v354
      %v356 = vpop.xlane.xlu0 %355
      %v357 = vrcp.pop 32.0
      %v358 = vmul.f32 %v311, %v357
      %v359 = vmul.f32 %v314, %v357
      %v360 = vmul.f32 %v317, %v357
      %v361 = vmul.f32 %v320, %v357
      %v362 = vmul.f32 %v323, %v357
      %v363 = vmul.f32 %v326, %v357
      %v364 = vmul.f32 %v329, %v357
      %v365 = vmul.f32 %v332, %v357
      %v366 = vmul.f32 %v335, %v357
      %v367 = vmul.f32 %v338, %v357
      %v368 = vmul.f32 %v341, %v357
      %v369 = vmul.f32 %v344, %v357
      %v370 = vmul.f32 %v347, %v357
      %v371 = vmul.f32 %v350, %v357
      %v372 = vmul.f32 %v353, %v357
      %v373 = vmul.f32 %v356, %v357
      %v374 = vsub.f32 %v228, %v358
      %v375 = vsub.f32 %v229, %v359
      %v376 = vsub.f32 %v230, %v360
      %v377 = vsub.f32 %v231, %v361
      %v378 = vsub.f32 %v232, %v362
      %v379 = vsub.f32 %v233, %v363
      %v380 = vsub.f32 %v234, %v364
      %v381 = vsub.f32 %v235, %v365
      %v382 = vsub.f32 %v236, %v366
      %v383 = vsub.f32 %v237, %v367
      %v384 = vsub.f32 %v238, %v368
      %v385 = vsub.f32 %v239, %v369
      %v386 = vsub.f32 %v240, %v370
      %v387 = vsub.f32 %v241, %v371
      %v388 = vsub.f32 %v242, %v372
      %v389 = vsub.f32 %v243, %v373
      %v390 = vmul.f32 %v374, %v374
      %v391 = vmul.f32 %v375, %v375
      %v392 = vmul.f32 %v376, %v376
      %v393 = vmul.f32 %v377, %v377
      %v394 = vmul.f32 %v378, %v378
      %v395 = vmul.f32 %v379, %v379
      %v396 = vmul.f32 %v380, %v380
      %v397 = vmul.f32 %v381, %v381
      %v398 = vmul.f32 %v382, %v382
      %v399 = vmul.f32 %v383, %v383
      %v400 = vmul.f32 %v384, %v384
      %v401 = vmul.f32 %v385, %v385
      %v402 = vmul.f32 %v386, %v386
      %v403 = vmul.f32 %v387, %v387
      %v404 = vmul.f32 %v388, %v388
      %v405 = vmul.f32 %v389, %v389
      %422 = vrot.lane.b32.xlu0 %v390, 124
      %v423 = vpop.permute.xlu0 %422
      %424 = vrot.lane.b32.xlu0 %v391, 124
      %v425 = vpop.permute.xlu0 %424
      %426 = vrot.lane.b32.xlu0 %v392, 124
      %v427 = vpop.permute.xlu0 %426
      %428 = vrot.lane.b32.xlu0 %v393, 124
      %v429 = vpop.permute.xlu0 %428
      %430 = vrot.lane.b32.xlu0 %v394, 124
      %v431 = vpop.permute.xlu0 %430
      %432 = vrot.lane.b32.xlu0 %v395, 124
      %v433 = vpop.permute.xlu0 %432
      %434 = vrot.lane.b32.xlu0 %v396, 124
      %v435 = vpop.permute.xlu0 %434
      %436 = vrot.lane.b32.xlu0 %v397, 124
      %v437 = vpop.permute.xlu0 %436
      %438 = vrot.lane.b32.xlu0 %v398, 124
      %v439 = vpop.permute.xlu0 %438
      %440 = vrot.lane.b32.xlu0 %v399, 124
      %v441 = vpop.permute.xlu0 %440
      %442 = vrot.lane.b32.xlu0 %v400, 124
      %v443 = vpop.permute.xlu0 %442
      %444 = vrot.lane.b32.xlu0 %v401, 124
      %v445 = vpop.permute.xlu0 %444
      %446 = vrot.lane.b32.xlu0 %v402, 124
      %v447 = vpop.permute.xlu0 %446
      %448 = vrot.lane.b32.xlu0 %v403, 124
      %v449 = vpop.permute.xlu0 %448
      %450 = vrot.lane.b32.xlu0 %v404, 124
      %v451 = vpop.permute.xlu0 %450
      %452 = vrot.lane.b32.xlu0 %v405, 124
      %v453 = vpop.permute.xlu0 %452
      %v470 = vsel %vm308, %v423, 0.0
      %471 = vadd.xlane.f32.xlu0 %v470
      %v472 = vpop.xlane.xlu0 %471
      %v473 = vsel %vm308, %v425, 0.0
      %474 = vadd.xlane.f32.xlu0 %v473
      %v475 = vpop.xlane.xlu0 %474
      %v476 = vsel %vm308, %v427, 0.0
      %477 = vadd.xlane.f32.xlu0 %v476
      %v478 = vpop.xlane.xlu0 %477
      %v479 = vsel %vm308, %v429, 0.0
      %480 = vadd.xlane.f32.xlu0 %v479
      %v481 = vpop.xlane.xlu0 %480
      %v482 = vsel %vm308, %v431, 0.0
      %483 = vadd.xlane.f32.xlu0 %v482
      %v484 = vpop.xlane.xlu0 %483
      %v485 = vsel %vm308, %v433, 0.0
      %486 = vadd.xlane.f32.xlu0 %v485
      %v487 = vpop.xlane.xlu0 %486
      %v488 = vsel %vm308, %v435, 0.0
      %489 = vadd.xlane.f32.xlu0 %v488
      %v490 = vpop.xlane.xlu0 %489
      %v491 = vsel %vm308, %v437, 0.0
      %492 = vadd.xlane.f32.xlu0 %v491
      %v493 = vpop.xlane.xlu0 %492
      %v494 = vsel %vm308, %v439, 0.0
      %495 = vadd.xlane.f32.xlu0 %v494
      %v496 = vpop.xlane.xlu0 %495
      %v497 = vsel %vm308, %v441, 0.0
      %498 = vadd.xlane.f32.xlu0 %v497
      %v499 = vpop.xlane.xlu0 %498
      %v500 = vsel %vm308, %v443, 0.0
      %501 = vadd.xlane.f32.xlu0 %v500
      %v502 = vpop.xlane.xlu0 %501
      %v503 = vsel %vm308, %v445, 0.0
      %504 = vadd.xlane.f32.xlu0 %v503
      %v505 = vpop.xlane.xlu0 %504
      %v506 = vsel %vm308, %v447, 0.0
      %507 = vadd.xlane.f32.xlu0 %v506
      %v508 = vpop.xlane.xlu0 %507
      %v509 = vsel %vm308, %v449, 0.0
      %510 = vadd.xlane.f32.xlu0 %v509
      %v511 = vpop.xlane.xlu0 %510
      %v512 = vsel %vm308, %v451, 0.0
      %513 = vadd.xlane.f32.xlu0 %v512
      %v514 = vpop.xlane.xlu0 %513
      %v515 = vsel %vm308, %v453, 0.0
      %516 = vadd.xlane.f32.xlu0 %v515
      %v517 = vpop.xlane.xlu0 %516
      %v518 = vmul.f32 %v472, %v357
      %v519 = vmul.f32 %v475, %v357
      %v520 = vmul.f32 %v478, %v357
      %v521 = vmul.f32 %v481, %v357
      %v522 = vmul.f32 %v484, %v357
      %v523 = vmul.f32 %v487, %v357
      %v524 = vmul.f32 %v490, %v357
      %v525 = vmul.f32 %v493, %v357
      %v526 = vmul.f32 %v496, %v357
      %v527 = vmul.f32 %v499, %v357
      %v528 = vmul.f32 %v502, %v357
      %v529 = vmul.f32 %v505, %v357
      %v530 = vmul.f32 %v508, %v357
      %v531 = vmul.f32 %v511, %v357
      %v532 = vmul.f32 %v514, %v357
      %v533 = vmul.f32 %v517, %v357
      %v534 = vadd.f32 %v518, 1e-05
      %v535 = vadd.f32 %v519, 1e-05
      %v536 = vadd.f32 %v520, 1e-05
      %v537 = vadd.f32 %v521, 1e-05
      %v538 = vadd.f32 %v522, 1e-05
      %v539 = vadd.f32 %v523, 1e-05
      %v540 = vadd.f32 %v524, 1e-05
      %v541 = vadd.f32 %v525, 1e-05
      %v542 = vadd.f32 %v526, 1e-05
      %v543 = vadd.f32 %v527, 1e-05
      %v544 = vadd.f32 %v528, 1e-05
      %v545 = vadd.f32 %v529, 1e-05
      %v546 = vadd.f32 %v530, 1e-05
      %v547 = vadd.f32 %v531, 1e-05
      %v548 = vadd.f32 %v532, 1e-05
      %v549 = vadd.f32 %v533, 1e-05
      %v550 = vrsqrt.pop %v534
      %v551 = vrsqrt.pop %v535
      %v552 = vrsqrt.pop %v536
      %v553 = vrsqrt.pop %v537
      %v554 = vrsqrt.pop %v538
      %v555 = vrsqrt.pop %v539
      %v556 = vrsqrt.pop %v540
      %v557 = vrsqrt.pop %v541
      %v558 = vrsqrt.pop %v542
      %v559 = vrsqrt.pop %v543
      %v560 = vrsqrt.pop %v544
      %v561 = vrsqrt.pop %v545
      %v562 = vrsqrt.pop %v546
      %v563 = vrsqrt.pop %v547
      %v564 = vrsqrt.pop %v548
      %v565 = vrsqrt.pop %v549
      %v566 = vld [vmem:[%s1] sm:$0xff]
      %v567 = vld [vmem:[%s1 + $0x8] sm:$0xff]
      %v568 = vld [vmem:[%s1 + $0x10] sm:$0xff]
      %v569 = vld [vmem:[%s1 + $0x18] sm:$0xff]
      %586 = vrot.lane.b32.xlu0 %v374, 124
      %v587 = vpop.permute.xlu0 %586
      %588 = vrot.lane.b32.xlu0 %v375, 124
      %v589 = vpop.permute.xlu0 %588
      %590 = vrot.lane.b32.xlu0 %v376, 124
      %v591 = vpop.permute.xlu0 %590
      %592 = vrot.lane.b32.xlu0 %v377, 124
      %v593 = vpop.permute.xlu0 %592
      %594 = vrot.lane.b32.xlu0 %v378, 124
      %v595 = vpop.permute.xlu0 %594
      %596 = vrot.lane.b32.xlu0 %v379, 124
      %v597 = vpop.permute.xlu0 %596
      %598 = vrot.lane.b32.xlu0 %v380, 124
      %v599 = vpop.permute.xlu0 %598
      %600 = vrot.lane.b32.xlu0 %v381, 124
      %v601 = vpop.permute.xlu0 %600
      %602 = vrot.lane.b32.xlu0 %v382, 124
      %v603 = vpop.permute.xlu0 %602
      %604 = vrot.lane.b32.xlu0 %v383, 124
      %v605 = vpop.permute.xlu0 %604
      %606 = vrot.lane.b32.xlu0 %v384, 124
      %v607 = vpop.permute.xlu0 %606
      %608 = vrot.lane.b32.xlu0 %v385, 124
      %v609 = vpop.permute.xlu0 %608
      %610 = vrot.lane.b32.xlu0 %v386, 124
      %v611 = vpop.permute.xlu0 %610
      %612 = vrot.lane.b32.xlu0 %v387, 124
      %v613 = vpop.permute.xlu0 %612
      %614 = vrot.lane.b32.xlu0 %v388, 124
      %v615 = vpop.permute.xlu0 %614
      %616 = vrot.lane.b32.xlu0 %v389, 124
      %v617 = vpop.permute.xlu0 %616
      %v618 = vsel %vm308, %v587, 0
      %v620 = vsel %vm308, %v589, 0
      %v622 = vsel %vm308, %v591, 0
      %v624 = vsel %vm308, %v593, 0
      %v626 = vsel %vm308, %v595, 0
      %v628 = vsel %vm308, %v597, 0
      %v630 = vsel %vm308, %v599, 0
      %v632 = vsel %vm308, %v601, 0
      %v634 = vsel %vm308, %v603, 0
      %v636 = vsel %vm308, %v605, 0
      %v638 = vsel %vm308, %v607, 0
      %v640 = vsel %vm308, %v609, 0
      %v642 = vsel %vm308, %v611, 0
      %v644 = vsel %vm308, %v613, 0
      %v646 = vsel %vm308, %v615, 0
      %v648 = vsel %vm308, %v617, 0
      %650 = vmatprep.subr.mxu0 0.0
      %651 = vmatpush1.msra.mxu0 %v566
      %652 = vmatprep.subr.mxu0 0.0
      %653 = vmatpush1.msra.mxu0 %v567
      %654 = vmatprep.subr.mxu0 0.0
      %655 = vmatpush1.msra.mxu0 %v568
      %656 = vmatprep.subr.mxu0 0.0
      %657 = vmatpush1.msra.mxu0 %v569
      %658 = vmatprep.subr.mxu0 0.0
      %659 = vmatpush1.msra.mxu0 0.0
      %660 = vmatprep.subr.mxu0 0.0
      %661 = vmatpush1.msra.mxu0 0.0
      %662 = vmatprep.subr.mxu0 0.0
      %663 = vmatpush1.msra.mxu0 0.0
      %664 = vmatprep.subr.mxu0 0.0
      %665 = vmatpush1.msra.mxu0 0.0
      %666 = vmatprep.subr.mxu0 0.0
      %667 = vmatpush1.msra.mxu0 0.0
      %668 = vmatprep.subr.mxu0 0.0
      %669 = vmatpush1.msra.mxu0 0.0
      %670 = vmatprep.subr.mxu0 0.0
      %671 = vmatpush1.msra.mxu0 0.0
      %672 = vmatprep.subr.mxu0 0.0
      %673 = vmatpush1.msra.mxu0 0.0
      %674 = vmatprep.subr.mxu0 0.0
      %675 = vmatpush1.msra.mxu0 0.0
      %676 = vmatprep.subr.mxu0 0.0
      %677 = vmatpush1.msra.mxu0 0.0
      %678 = vmatprep.subr.mxu0 0.0
      %679 = vmatpush1.msra.mxu0 0.0
      %680 = vmatprep.subr.mxu0 0.0
      %681 = vmatpush1.msra.mxu0 0.0
      %682 = vmatprep.subr.mxu0 0.0
      %683 = vmatpush1.msra.mxu0 0.0
      %684 = vmatprep.subr.mxu0 0.0
      %685 = vmatpush1.msra.mxu0 0.0
      %686 = vmatprep.subr.mxu0 0.0
      %687 = vmatpush1.msra.mxu0 0.0
      %688 = vmatprep.subr.mxu0 0.0
      %689 = vmatpush1.msra.mxu0 0.0
      %690 = vmatprep.subr.mxu0 0.0
      %691 = vmatpush1.msra.mxu0 0.0
      %692 = vmatprep.subr.mxu0 0.0
      %693 = vmatpush1.msra.mxu0 0.0
      %694 = vmatprep.subr.mxu0 0.0
      %695 = vmatpush1.msra.mxu0 0.0
      %696 = vmatprep.subr.mxu0 0.0
      %697 = vmatpush1.msra.mxu0 0.0
      %698 = vmatprep.subr.mxu0 0.0
      %699 = vmatpush1.msra.mxu0 0.0
      %700 = vmatprep.subr.mxu0 0.0
      %701 = vmatpush1.msra.mxu0 0.0
      %702 = vmatprep.subr.mxu0 0.0
      %703 = vmatpush1.msra.mxu0 0.0
      %704 = vmatprep.subr.mxu0 0.0
      %705 = vmatpush1.msra.mxu0 0.0
      %706 = vmatprep.subr.mxu0 0.0
      %707 = vmatpush1.msra.mxu0 0.0
      %708 = vmatprep.subr.mxu0 0.0
      %709 = vmatpush1.msra.mxu0 0.0
      %710 = vmatprep.subr.mxu0 0.0
      %711 = vmatpush1.msra.mxu0 0.0
      %712 = vmatprep.subr.mxu0 0.0
      %713 = vmatpush1.msra.mxu0 0.0
      %714 = vmatprep.mubr.f32.mxu0 0.0
      %715 = vmatmul.mubr.f32.gmra.mrb[0].mxu0 %v618
      %v716 = vpop.f32.mrb[0].mxu0
      %v717 = vadd.f32 0.0, %v716
      %v718 = vpop.f32.mrb[0].mxu0
      %719 = vmatprep.mubr.f32.mxu0 0.0
      %720 = vmatmul.mubr.f32.gmra.mrb[0].mxu0 %v620
      %v721 = vpop.f32.mrb[0].mxu0
      %v722 = vadd.f32 0.0, %v721
      %v723 = vpop.f32.mrb[0].mxu0
      %724 = vmatprep.mubr.f32.mxu0 0.0
      %725 = vmatmul.mubr.f32.gmra.mrb[0].mxu0 %v622
      %v726 = vpop.f32.mrb[0].mxu0
      %v727 = vadd.f32 0.0, %v726
      %v728 = vpop.f32.mrb[0].mxu0
      %729 = vmatprep.mubr.f32.mxu0 0.0
      %730 = vmatmul.mubr.f32.gmra.mrb[0].mxu0 %v624
      %v731 = vpop.f32.mrb[0].mxu0
      %v732 = vadd.f32 0.0, %v731
      %v733 = vpop.f32.mrb[0].mxu0
      %734 = vmatprep.mubr.f32.mxu0 0.0
      %735 = vmatmul.mubr.f32.gmra.mrb[0].mxu0 %v626
      %v736 = vpop.f32.mrb[0].mxu0
      %v737 = vadd.f32 0.0, %v736
      %v738 = vpop.f32.mrb[0].mxu0
      %739 = vmatprep.mubr.f32.mxu0 0.0
      %740 = vmatmul.mubr.f32.gmra.mrb[0].mxu0 %v628
      %v741 = vpop.f32.mrb[0].mxu0
      %v742 = vadd.f32 0.0, %v741
      %v743 = vpop.f32.mrb[0].mxu0
      %744 = vmatprep.mubr.f32.mxu0 0.0
      %745 = vmatmul.mubr.f32.gmra.mrb[0].mxu0 %v630
      %v746 = vpop.f32.mrb[0].mxu0
      %v747 = vadd.f32 0.0, %v746
      %v748 = vpop.f32.mrb[0].mxu0
      %749 = vmatprep.mubr.f32.mxu0 0.0
      %750 = vmatmul.mubr.f32.gmra.mrb[0].mxu0 %v632
      %v751 = vpop.f32.mrb[0].mxu0
      %v752 = vadd.f32 0.0, %v751
      %v753 = vpop.f32.mrb[0].mxu0
      %754 = vmatprep.mubr.f32.mxu0 0.0
      %755 = vmatmul.mubr.f32.gmra.mrb[0].mxu0 %v634
      %v756 = vpop.f32.mrb[0].mxu0
      %v757 = vadd.f32 0.0, %v756
      %v758 = vpop.f32.mrb[0].mxu0
      %759 = vmatprep.mubr.f32.mxu0 0.0
      %760 = vmatmul.mubr.f32.gmra.mrb[0].mxu0 %v636
      %v761 = vpop.f32.mrb[0].mxu0
      %v762 = vadd.f32 0.0, %v761
      %v763 = vpop.f32.mrb[0].mxu0
      %764 = vmatprep.mubr.f32.mxu0 0.0
      %765 = vmatmul.mubr.f32.gmra.mrb[0].mxu0 %v638
      %v766 = vpop.f32.mrb[0].mxu0
      %v767 = vadd.f32 0.0, %v766
      %v768 = vpop.f32.mrb[0].mxu0
      %769 = vmatprep.mubr.f32.mxu0 0.0
      %770 = vmatmul.mubr.f32.gmra.mrb[0].mxu0 %v640
      %v771 = vpop.f32.mrb[0].mxu0
      %v772 = vadd.f32 0.0, %v771
      %v773 = vpop.f32.mrb[0].mxu0
      %774 = vmatprep.mubr.f32.mxu0 0.0
      %775 = vmatmul.mubr.f32.gmra.mrb[0].mxu0 %v642
      %v776 = vpop.f32.mrb[0].mxu0
      %v777 = vadd.f32 0.0, %v776
      %v778 = vpop.f32.mrb[0].mxu0
      %779 = vmatprep.mubr.f32.mxu0 0.0
      %780 = vmatmul.mubr.f32.gmra.mrb[0].mxu0 %v644
      %v781 = vpop.f32.mrb[0].mxu0
      %v782 = vadd.f32 0.0, %v781
      %v783 = vpop.f32.mrb[0].mxu0
      %784 = vmatprep.mubr.f32.mxu0 0.0
      %785 = vmatmul.mubr.f32.gmra.mrb[0].mxu0 %v646
      %v786 = vpop.f32.mrb[0].mxu0
      %v787 = vadd.f32 0.0, %v786
      %v788 = vpop.f32.mrb[0].mxu0
      %789 = vmatprep.mubr.f32.mxu0 0.0
      %790 = vmatmul.mubr.f32.gmra.mrb[0].mxu0 %v648
      %v791 = vpop.f32.mrb[0].mxu0
      %v792 = vadd.f32 0.0, %v791
      %v793 = vpop.f32.mrb[0].mxu0
      %794 = vdwg.mxu0
      %v795 = vmul.f32 %v717, %v550
      %v796 = vmul.f32 %v722, %v551
      %v797 = vmul.f32 %v727, %v552
      %v798 = vmul.f32 %v732, %v553
      %v799 = vmul.f32 %v737, %v554
      %v800 = vmul.f32 %v742, %v555
      %v801 = vmul.f32 %v747, %v556
      %v802 = vmul.f32 %v752, %v557
      %v803 = vmul.f32 %v757, %v558
      %v804 = vmul.f32 %v762, %v559
      %v805 = vmul.f32 %v767, %v560
      %v806 = vmul.f32 %v772, %v561
      %v807 = vmul.f32 %v777, %v562
      %v808 = vmul.f32 %v782, %v563
      %v809 = vmul.f32 %v787, %v564
      %v810 = vmul.f32 %v792, %v565
      %v811 = vld [vmem:[%s2] sm:$0x1]
      %v813 = vlaneseq
      %v814 = vshrl.u32 %v813, 7
      %v815 = vsub.s32 0, %v814
      %v816 = vrot.slane %v811, %v815
      %v818 = vadd.f32 %v795, %v816
      %v819 = vadd.f32 %v796, %v816
      %v820 = vadd.f32 %v797, %v816
      %v821 = vadd.f32 %v798, %v816
      %v822 = vadd.f32 %v799, %v816
      %v823 = vadd.f32 %v800, %v816
      %v824 = vadd.f32 %v801, %v816
      %v825 = vadd.f32 %v802, %v816
      %v826 = vadd.f32 %v803, %v816
      %v827 = vadd.f32 %v804, %v816
      %v828 = vadd.f32 %v805, %v816
      %v829 = vadd.f32 %v806, %v816
      %v830 = vadd.f32 %v807, %v816
      %v831 = vadd.f32 %v808, %v816
      %v832 = vadd.f32 %v809, %v816
      %v833 = vadd.f32 %v810, %v816
      %vm834 = vcmp.ge.f32.partialorder %v818, 0.0
      %vm835 = vcmp.ge.f32.partialorder %v819, 0.0
      %vm836 = vcmp.ge.f32.partialorder %v820, 0.0
      %vm837 = vcmp.ge.f32.partialorder %v821, 0.0
      %vm838 = vcmp.ge.f32.partialorder %v822, 0.0
      %vm839 = vcmp.ge.f32.partialorder %v823, 0.0
      %vm840 = vcmp.ge.f32.partialorder %v824, 0.0
      %vm841 = vcmp.ge.f32.partialorder %v825, 0.0
      %vm842 = vcmp.ge.f32.partialorder %v826, 0.0
      %vm843 = vcmp.ge.f32.partialorder %v827, 0.0
      %vm844 = vcmp.ge.f32.partialorder %v828, 0.0
      %vm845 = vcmp.ge.f32.partialorder %v829, 0.0
      %vm846 = vcmp.ge.f32.partialorder %v830, 0.0
      %vm847 = vcmp.ge.f32.partialorder %v831, 0.0
      %vm848 = vcmp.ge.f32.partialorder %v832, 0.0
      %vm849 = vcmp.ge.f32.partialorder %v833, 0.0
      %v850 = vmul.f32 %v818, 0.01
      %v851 = vmul.f32 %v819, 0.01
      %v852 = vmul.f32 %v820, 0.01
      %v853 = vmul.f32 %v821, 0.01
      %v854 = vmul.f32 %v822, 0.01
      %v855 = vmul.f32 %v823, 0.01
      %v856 = vmul.f32 %v824, 0.01
      %v857 = vmul.f32 %v825, 0.01
      %v858 = vmul.f32 %v826, 0.01
      %v859 = vmul.f32 %v827, 0.01
      %v860 = vmul.f32 %v828, 0.01
      %v861 = vmul.f32 %v829, 0.01
      %v862 = vmul.f32 %v830, 0.01
      %v863 = vmul.f32 %v831, 0.01
      %v864 = vmul.f32 %v832, 0.01
      %v865 = vmul.f32 %v833, 0.01
      %v866 = vsel %vm834, %v818, %v850
      %v867 = vsel %vm835, %v819, %v851
      %v868 = vsel %vm836, %v820, %v852
      %v869 = vsel %vm837, %v821, %v853
      %v870 = vsel %vm838, %v822, %v854
      %v871 = vsel %vm839, %v823, %v855
      %v872 = vsel %vm840, %v824, %v856
      %v873 = vsel %vm841, %v825, %v857
      %v874 = vsel %vm842, %v826, %v858
      %v875 = vsel %vm843, %v827, %v859
      %v876 = vsel %vm844, %v828, %v860
      %v877 = vsel %vm845, %v829, %v861
      %v878 = vsel %vm846, %v830, %v862
      %v879 = vsel %vm847, %v831, %v863
      %v880 = vsel %vm848, %v832, %v864
      %v881 = vsel %vm849, %v833, %v865
      %vm882 = vcmask 130048
      %v883 = vsel %vm882, %v866, 0.0
      %884 = vadd.xlane.f32.xlu0 %v883
      %v885 = vpop.xlane.xlu0 %884
      %v886 = vsel %vm882, %v867, 0.0
      %887 = vadd.xlane.f32.xlu0 %v886
      %v888 = vpop.xlane.xlu0 %887
      %v889 = vsel %vm882, %v868, 0.0
      %890 = vadd.xlane.f32.xlu0 %v889
      %v891 = vpop.xlane.xlu0 %890
      %v892 = vsel %vm882, %v869, 0.0
      %893 = vadd.xlane.f32.xlu0 %v892
      %v894 = vpop.xlane.xlu0 %893
      %v895 = vsel %vm882, %v870, 0.0
      %896 = vadd.xlane.f32.xlu0 %v895
      %v897 = vpop.xlane.xlu0 %896
      %v898 = vsel %vm882, %v871, 0.0
      %899 = vadd.xlane.f32.xlu0 %v898
      %v900 = vpop.xlane.xlu0 %899
      %v901 = vsel %vm882, %v872, 0.0
      %902 = vadd.xlane.f32.xlu0 %v901
      %v903 = vpop.xlane.xlu0 %902
      %v904 = vsel %vm882, %v873, 0.0
      %905 = vadd.xlane.f32.xlu0 %v904
      %v906 = vpop.xlane.xlu0 %905
      %v907 = vsel %vm882, %v874, 0.0
      %908 = vadd.xlane.f32.xlu0 %v907
      %v909 = vpop.xlane.xlu0 %908
      %v910 = vsel %vm882, %v875, 0.0
      %911 = vadd.xlane.f32.xlu0 %v910
      %v912 = vpop.xlane.xlu0 %911
      %v913 = vsel %vm882, %v876, 0.0
      %914 = vadd.xlane.f32.xlu0 %v913
      %v915 = vpop.xlane.xlu0 %914
      %v916 = vsel %vm882, %v877, 0.0
      %917 = vadd.xlane.f32.xlu0 %v916
      %v918 = vpop.xlane.xlu0 %917
      %v919 = vsel %vm882, %v878, 0.0
      %920 = vadd.xlane.f32.xlu0 %v919
      %v921 = vpop.xlane.xlu0 %920
      %v922 = vsel %vm882, %v879, 0.0
      %923 = vadd.xlane.f32.xlu0 %v922
      %v924 = vpop.xlane.xlu0 %923
      %v925 = vsel %vm882, %v880, 0.0
      %926 = vadd.xlane.f32.xlu0 %v925
      %v927 = vpop.xlane.xlu0 %926
      %v928 = vsel %vm882, %v881, 0.0
      %929 = vadd.xlane.f32.xlu0 %v928
      %v930 = vpop.xlane.xlu0 %929
      %v931 = vrcp.pop 16.0
      %v932 = vmul.f32 %v885, %v931
      %v933 = vmul.f32 %v888, %v931
      %v934 = vmul.f32 %v891, %v931
      %v935 = vmul.f32 %v894, %v931
      %v936 = vmul.f32 %v897, %v931
      %v937 = vmul.f32 %v900, %v931
      %v938 = vmul.f32 %v903, %v931
      %v939 = vmul.f32 %v906, %v931
      %v940 = vmul.f32 %v909, %v931
      %v941 = vmul.f32 %v912, %v931
      %v942 = vmul.f32 %v915, %v931
      %v943 = vmul.f32 %v918, %v931
      %v944 = vmul.f32 %v921, %v931
      %v945 = vmul.f32 %v924, %v931
      %v946 = vmul.f32 %v927, %v931
      %v947 = vmul.f32 %v930, %v931
      %v948 = vsub.f32 %v866, %v932
      %v949 = vsub.f32 %v867, %v933
      %v950 = vsub.f32 %v868, %v934
      %v951 = vsub.f32 %v869, %v935
      %v952 = vsub.f32 %v870, %v936
      %v953 = vsub.f32 %v871, %v937
      %v954 = vsub.f32 %v872, %v938
      %v955 = vsub.f32 %v873, %v939
      %v956 = vsub.f32 %v874, %v940
      %v957 = vsub.f32 %v875, %v941
      %v958 = vsub.f32 %v876, %v942
      %v959 = vsub.f32 %v877, %v943
      %v960 = vsub.f32 %v878, %v944
      %v961 = vsub.f32 %v879, %v945
      %v962 = vsub.f32 %v880, %v946
      %v963 = vsub.f32 %v881, %v947
      %v964 = vmul.f32 %v948, %v948
      %v965 = vmul.f32 %v949, %v949
      %v966 = vmul.f32 %v950, %v950
      %v967 = vmul.f32 %v951, %v951
      %v968 = vmul.f32 %v952, %v952
      %v969 = vmul.f32 %v953, %v953
      %v970 = vmul.f32 %v954, %v954
      %v971 = vmul.f32 %v955, %v955
      %v972 = vmul.f32 %v956, %v956
      %v973 = vmul.f32 %v957, %v957
      %v974 = vmul.f32 %v958, %v958
      %v975 = vmul.f32 %v959, %v959
      %v976 = vmul.f32 %v960, %v960
      %v977 = vmul.f32 %v961, %v961
      %v978 = vmul.f32 %v962, %v962
      %v979 = vmul.f32 %v963, %v963
      %v980 = vsel %vm882, %v964, 0.0
      %981 = vadd.xlane.f32.xlu0 %v980
      %v982 = vpop.xlane.xlu0 %981
      %v983 = vsel %vm882, %v965, 0.0
      %984 = vadd.xlane.f32.xlu0 %v983
      %v985 = vpop.xlane.xlu0 %984
      %v986 = vsel %vm882, %v966, 0.0
      %987 = vadd.xlane.f32.xlu0 %v986
      %v988 = vpop.xlane.xlu0 %987
      %v989 = vsel %vm882, %v967, 0.0
      %990 = vadd.xlane.f32.xlu0 %v989
      %v991 = vpop.xlane.xlu0 %990
      %v992 = vsel %vm882, %v968, 0.0
      %993 = vadd.xlane.f32.xlu0 %v992
      %v994 = vpop.xlane.xlu0 %993
      %v995 = vsel %vm882, %v969, 0.0
      %996 = vadd.xlane.f32.xlu0 %v995
      %v997 = vpop.xlane.xlu0 %996
      %v998 = vsel %vm882, %v970, 0.0
      %999 = vadd.xlane.f32.xlu0 %v998
      %v1000 = vpop.xlane.xlu0 %999
      %v1001 = vsel %vm882, %v971, 0.0
      %1002 = vadd.xlane.f32.xlu0 %v1001
      %v1003 = vpop.xlane.xlu0 %1002
      %v1004 = vsel %vm882, %v972, 0.0
      %1005 = vadd.xlane.f32.xlu0 %v1004
      %v1006 = vpop.xlane.xlu0 %1005
      %v1007 = vsel %vm882, %v973, 0.0
      %1008 = vadd.xlane.f32.xlu0 %v1007
      %v1009 = vpop.xlane.xlu0 %1008
      %v1010 = vsel %vm882, %v974, 0.0
      %1011 = vadd.xlane.f32.xlu0 %v1010
      %v1012 = vpop.xlane.xlu0 %1011
      %v1013 = vsel %vm882, %v975, 0.0
      %1014 = vadd.xlane.f32.xlu0 %v1013
      %v1015 = vpop.xlane.xlu0 %1014
      %v1016 = vsel %vm882, %v976, 0.0
      %1017 = vadd.xlane.f32.xlu0 %v1016
      %v1018 = vpop.xlane.xlu0 %1017
      %v1019 = vsel %vm882, %v977, 0.0
      %1020 = vadd.xlane.f32.xlu0 %v1019
      %v1021 = vpop.xlane.xlu0 %1020
      %v1022 = vsel %vm882, %v978, 0.0
      %1023 = vadd.xlane.f32.xlu0 %v1022
      %v1024 = vpop.xlane.xlu0 %1023
      %v1025 = vsel %vm882, %v979, 0.0
      %1026 = vadd.xlane.f32.xlu0 %v1025
      %v1027 = vpop.xlane.xlu0 %1026
      %v1028 = vmul.f32 %v982, %v931
      %v1029 = vmul.f32 %v985, %v931
      %v1030 = vmul.f32 %v988, %v931
      %v1031 = vmul.f32 %v991, %v931
      %v1032 = vmul.f32 %v994, %v931
      %v1033 = vmul.f32 %v997, %v931
      %v1034 = vmul.f32 %v1000, %v931
      %v1035 = vmul.f32 %v1003, %v931
      %v1036 = vmul.f32 %v1006, %v931
      %v1037 = vmul.f32 %v1009, %v931
      %v1038 = vmul.f32 %v1012, %v931
      %v1039 = vmul.f32 %v1015, %v931
      %v1040 = vmul.f32 %v1018, %v931
      %v1041 = vmul.f32 %v1021, %v931
      %v1042 = vmul.f32 %v1024, %v931
      %v1043 = vmul.f32 %v1027, %v931
      %v1044 = vadd.f32 %v1028, 1e-05
      %v1045 = vadd.f32 %v1029, 1e-05
      %v1046 = vadd.f32 %v1030, 1e-05
      %v1047 = vadd.f32 %v1031, 1e-05
      %v1048 = vadd.f32 %v1032, 1e-05
      %v1049 = vadd.f32 %v1033, 1e-05
      %v1050 = vadd.f32 %v1034, 1e-05
      %v1051 = vadd.f32 %v1035, 1e-05
      %v1052 = vadd.f32 %v1036, 1e-05
      %v1053 = vadd.f32 %v1037, 1e-05
      %v1054 = vadd.f32 %v1038, 1e-05
      %v1055 = vadd.f32 %v1039, 1e-05
      %v1056 = vadd.f32 %v1040, 1e-05
      %v1057 = vadd.f32 %v1041, 1e-05
      %v1058 = vadd.f32 %v1042, 1e-05
      %v1059 = vadd.f32 %v1043, 1e-05
      %v1060 = vrsqrt.pop %v1044
      %v1061 = vrsqrt.pop %v1045
      %v1062 = vrsqrt.pop %v1046
      %v1063 = vrsqrt.pop %v1047
      %v1064 = vrsqrt.pop %v1048
      %v1065 = vrsqrt.pop %v1049
      %v1066 = vrsqrt.pop %v1050
      %v1067 = vrsqrt.pop %v1051
      %v1068 = vrsqrt.pop %v1052
      %v1069 = vrsqrt.pop %v1053
      %v1070 = vrsqrt.pop %v1054
      %v1071 = vrsqrt.pop %v1055
      %v1072 = vrsqrt.pop %v1056
      %v1073 = vrsqrt.pop %v1057
      %v1074 = vrsqrt.pop %v1058
      %v1075 = vrsqrt.pop %v1059
      %v1076 = vld [vmem:[%s3] sm:$0xff]
      %v1077 = vld [vmem:[%s3 + $0x8] sm:$0xff]
      %v1079 = vsel %vm882, %v948, 0
      %v1082 = vsel %vm882, %v949, 0
      %v1085 = vsel %vm882, %v950, 0
      %v1088 = vsel %vm882, %v951, 0
      %v1091 = vsel %vm882, %v952, 0
      %v1094 = vsel %vm882, %v953, 0
      %v1097 = vsel %vm882, %v954, 0
      %v1100 = vsel %vm882, %v955, 0
      %v1103 = vsel %vm882, %v956, 0
      %v1106 = vsel %vm882, %v957, 0
      %v1109 = vsel %vm882, %v958, 0
      %v1112 = vsel %vm882, %v959, 0
      %v1115 = vsel %vm882, %v960, 0
      %v1118 = vsel %vm882, %v961, 0
      %v1121 = vsel %vm882, %v962, 0
      %v1124 = vsel %vm882, %v963, 0
      %1126 = vmatprep.subr.mxu0 0.0
      %1127 = vmatpush1.msra.mxu0 %v1076
      %1128 = vmatprep.subr.mxu0 0.0
      %1129 = vmatpush1.msra.mxu0 %v1077
      %1130 = vmatprep.subr.mxu0 0.0
      %1131 = vmatpush1.msra.mxu0 0.0
      %1132 = vmatprep.subr.mxu0 0.0
      %1133 = vmatpush1.msra.mxu0 0.0
      %1134 = vmatprep.subr.mxu0 0.0
      %1135 = vmatpush1.msra.mxu0 0.0
      %1136 = vmatprep.subr.mxu0 0.0
      %1137 = vmatpush1.msra.mxu0 0.0
      %1138 = vmatprep.subr.mxu0 0.0
      %1139 = vmatpush1.msra.mxu0 0.0
      %1140 = vmatprep.subr.mxu0 0.0
      %1141 = vmatpush1.msra.mxu0 0.0
      %1142 = vmatprep.subr.mxu0 0.0
      %1143 = vmatpush1.msra.mxu0 0.0
      %1144 = vmatprep.subr.mxu0 0.0
      %1145 = vmatpush1.msra.mxu0 0.0
      %1146 = vmatprep.subr.mxu0 0.0
      %1147 = vmatpush1.msra.mxu0 0.0
      %1148 = vmatprep.subr.mxu0 0.0
      %1149 = vmatpush1.msra.mxu0 0.0
      %1150 = vmatprep.subr.mxu0 0.0
      %1151 = vmatpush1.msra.mxu0 0.0
      %1152 = vmatprep.subr.mxu0 0.0
      %1153 = vmatpush1.msra.mxu0 0.0
      %1154 = vmatprep.subr.mxu0 0.0
      %1155 = vmatpush1.msra.mxu0 0.0
      %1156 = vmatprep.subr.mxu0 0.0
      %1157 = vmatpush1.msra.mxu0 0.0
      %1158 = vmatprep.subr.mxu0 0.0
      %1159 = vmatpush1.msra.mxu0 0.0
      %1160 = vmatprep.subr.mxu0 0.0
      %1161 = vmatpush1.msra.mxu0 0.0
      %1162 = vmatprep.subr.mxu0 0.0
      %1163 = vmatpush1.msra.mxu0 0.0
      %1164 = vmatprep.subr.mxu0 0.0
      %1165 = vmatpush1.msra.mxu0 0.0
      %1166 = vmatprep.subr.mxu0 0.0
      %1167 = vmatpush1.msra.mxu0 0.0
      %1168 = vmatprep.subr.mxu0 0.0
      %1169 = vmatpush1.msra.mxu0 0.0
      %1170 = vmatprep.subr.mxu0 0.0
      %1171 = vmatpush1.msra.mxu0 0.0
      %1172 = vmatprep.subr.mxu0 0.0
      %1173 = vmatpush1.msra.mxu0 0.0
      %1174 = vmatprep.subr.mxu0 0.0
      %1175 = vmatpush1.msra.mxu0 0.0
      %1176 = vmatprep.subr.mxu0 0.0
      %1177 = vmatpush1.msra.mxu0 0.0
      %1178 = vmatprep.subr.mxu0 0.0
      %1179 = vmatpush1.msra.mxu0 0.0
      %1180 = vmatprep.subr.mxu0 0.0
      %1181 = vmatpush1.msra.mxu0 0.0
      %1182 = vmatprep.subr.mxu0 0.0
      %1183 = vmatpush1.msra.mxu0 0.0
      %1184 = vmatprep.subr.mxu0 0.0
      %1185 = vmatpush1.msra.mxu0 0.0
      %1186 = vmatprep.subr.mxu0 0.0
      %1187 = vmatpush1.msra.mxu0 0.0
      %1188 = vmatprep.subr.mxu0 0.0
      %1189 = vmatpush1.msra.mxu0 0.0
      %1190 = vmatprep.mubr.f32.mxu0 0.0
      %1191 = vmatmul.mubr.f32.gmra.mrb[0].mxu0 %v1079
      %v1192 = vpop.f32.mrb[0].mxu0
      %v1193 = vadd.f32 0.0, %v1192
      %v1194 = vpop.f32.mrb[0].mxu0
      %1195 = vmatprep.mubr.f32.mxu0 0.0
      %1196 = vmatmul.mubr.f32.gmra.mrb[0].mxu0 %v1082
      %v1197 = vpop.f32.mrb[0].mxu0
      %v1198 = vadd.f32 0.0, %v1197
      %v1199 = vpop.f32.mrb[0].mxu0
      %1200 = vmatprep.mubr.f32.mxu0 0.0
      %1201 = vmatmul.mubr.f32.gmra.mrb[0].mxu0 %v1085
      %v1202 = vpop.f32.mrb[0].mxu0
      %v1203 = vadd.f32 0.0, %v1202
      %v1204 = vpop.f32.mrb[0].mxu0
      %1205 = vmatprep.mubr.f32.mxu0 0.0
      %1206 = vmatmul.mubr.f32.gmra.mrb[0].mxu0 %v1088
      %v1207 = vpop.f32.mrb[0].mxu0
      %v1208 = vadd.f32 0.0, %v1207
      %v1209 = vpop.f32.mrb[0].mxu0
      %1210 = vmatprep.mubr.f32.mxu0 0.0
      %1211 = vmatmul.mubr.f32.gmra.mrb[0].mxu0 %v1091
      %v1212 = vpop.f32.mrb[0].mxu0
      %v1213 = vadd.f32 0.0, %v1212
      %v1214 = vpop.f32.mrb[0].mxu0
      %1215 = vmatprep.mubr.f32.mxu0 0.0
      %1216 = vmatmul.mubr.f32.gmra.mrb[0].mxu0 %v1094
      %v1217 = vpop.f32.mrb[0].mxu0
      %v1218 = vadd.f32 0.0, %v1217
      %v1219 = vpop.f32.mrb[0].mxu0
      %1220 = vmatprep.mubr.f32.mxu0 0.0
      %1221 = vmatmul.mubr.f32.gmra.mrb[0].mxu0 %v1097
      %v1222 = vpop.f32.mrb[0].mxu0
      %v1223 = vadd.f32 0.0, %v1222
      %v1224 = vpop.f32.mrb[0].mxu0
      %1225 = vmatprep.mubr.f32.mxu0 0.0
      %1226 = vmatmul.mubr.f32.gmra.mrb[0].mxu0 %v1100
      %v1227 = vpop.f32.mrb[0].mxu0
      %v1228 = vadd.f32 0.0, %v1227
      %v1229 = vpop.f32.mrb[0].mxu0
      %1230 = vmatprep.mubr.f32.mxu0 0.0
      %1231 = vmatmul.mubr.f32.gmra.mrb[0].mxu0 %v1103
      %v1232 = vpop.f32.mrb[0].mxu0
      %v1233 = vadd.f32 0.0, %v1232
      %v1234 = vpop.f32.mrb[0].mxu0
      %1235 = vmatprep.mubr.f32.mxu0 0.0
      %1236 = vmatmul.mubr.f32.gmra.mrb[0].mxu0 %v1106
      %v1237 = vpop.f32.mrb[0].mxu0
      %v1238 = vadd.f32 0.0, %v1237
      %v1239 = vpop.f32.mrb[0].mxu0
      %1240 = vmatprep.mubr.f32.mxu0 0.0
      %1241 = vmatmul.mubr.f32.gmra.mrb[0].mxu0 %v1109
      %v1242 = vpop.f32.mrb[0].mxu0
      %v1243 = vadd.f32 0.0, %v1242
      %v1244 = vpop.f32.mrb[0].mxu0
      %1245 = vmatprep.mubr.f32.mxu0 0.0
      %1246 = vmatmul.mubr.f32.gmra.mrb[0].mxu0 %v1112
      %v1247 = vpop.f32.mrb[0].mxu0
      %v1248 = vadd.f32 0.0, %v1247
      %v1249 = vpop.f32.mrb[0].mxu0
      %1250 = vmatprep.mubr.f32.mxu0 0.0
      %1251 = vmatmul.mubr.f32.gmra.mrb[0].mxu0 %v1115
      %v1252 = vpop.f32.mrb[0].mxu0
      %v1253 = vadd.f32 0.0, %v1252
      %v1254 = vpop.f32.mrb[0].mxu0
      %1255 = vmatprep.mubr.f32.mxu0 0.0
      %1256 = vmatmul.mubr.f32.gmra.mrb[0].mxu0 %v1118
      %v1257 = vpop.f32.mrb[0].mxu0
      %v1258 = vadd.f32 0.0, %v1257
      %v1259 = vpop.f32.mrb[0].mxu0
      %1260 = vmatprep.mubr.f32.mxu0 0.0
      %1261 = vmatmul.mubr.f32.gmra.mrb[0].mxu0 %v1121
      %v1262 = vpop.f32.mrb[0].mxu0
      %v1263 = vadd.f32 0.0, %v1262
      %v1264 = vpop.f32.mrb[0].mxu0
      %1265 = vmatprep.mubr.f32.mxu0 0.0
      %1266 = vmatmul.mubr.f32.gmra.mrb[0].mxu0 %v1124
      %v1267 = vpop.f32.mrb[0].mxu0
      %v1268 = vadd.f32 0.0, %v1267
      %v1269 = vpop.f32.mrb[0].mxu0
      %1270 = vdwg.mxu0
      %v1271 = vmul.f32 %v1193, %v1060
      %v1272 = vmul.f32 %v1198, %v1061
      %v1273 = vmul.f32 %v1203, %v1062
      %v1274 = vmul.f32 %v1208, %v1063
      %v1275 = vmul.f32 %v1213, %v1064
      %v1276 = vmul.f32 %v1218, %v1065
      %v1277 = vmul.f32 %v1223, %v1066
      %v1278 = vmul.f32 %v1228, %v1067
      %v1279 = vmul.f32 %v1233, %v1068
      %v1280 = vmul.f32 %v1238, %v1069
      %v1281 = vmul.f32 %v1243, %v1070
      %v1282 = vmul.f32 %v1248, %v1071
      %v1283 = vmul.f32 %v1253, %v1072
      %v1284 = vmul.f32 %v1258, %v1073
      %v1285 = vmul.f32 %v1263, %v1074
      %v1286 = vmul.f32 %v1268, %v1075
      %v1287 = vld [vmem:[%s4] sm:$0x1]
      %v1289 = vlaneseq
      %v1290 = vshrl.u32 %v1289, 7
      %v1291 = vsub.s32 0, %v1290
      %v1292 = vrot.slane %v1287, %v1291
      %v1294 = vadd.f32 %v1271, %v1292
      %v1295 = vadd.f32 %v1272, %v1292
      %v1296 = vadd.f32 %v1273, %v1292
      %v1297 = vadd.f32 %v1274, %v1292
      %v1298 = vadd.f32 %v1275, %v1292
      %v1299 = vadd.f32 %v1276, %v1292
      %v1300 = vadd.f32 %v1277, %v1292
      %v1301 = vadd.f32 %v1278, %v1292
      %v1302 = vadd.f32 %v1279, %v1292
      %v1303 = vadd.f32 %v1280, %v1292
      %v1304 = vadd.f32 %v1281, %v1292
      %v1305 = vadd.f32 %v1282, %v1292
      %v1306 = vadd.f32 %v1283, %v1292
      %v1307 = vadd.f32 %v1284, %v1292
      %v1308 = vadd.f32 %v1285, %v1292
      %v1309 = vadd.f32 %v1286, %v1292
      %vm1310 = vcmp.ge.f32.partialorder %v1294, 0.0
      %vm1311 = vcmp.ge.f32.partialorder %v1295, 0.0
      %vm1312 = vcmp.ge.f32.partialorder %v1296, 0.0
      %vm1313 = vcmp.ge.f32.partialorder %v1297, 0.0
      %vm1314 = vcmp.ge.f32.partialorder %v1298, 0.0
      %vm1315 = vcmp.ge.f32.partialorder %v1299, 0.0
      %vm1316 = vcmp.ge.f32.partialorder %v1300, 0.0
      %vm1317 = vcmp.ge.f32.partialorder %v1301, 0.0
      %vm1318 = vcmp.ge.f32.partialorder %v1302, 0.0
      %vm1319 = vcmp.ge.f32.partialorder %v1303, 0.0
      %vm1320 = vcmp.ge.f32.partialorder %v1304, 0.0
      %vm1321 = vcmp.ge.f32.partialorder %v1305, 0.0
      %vm1322 = vcmp.ge.f32.partialorder %v1306, 0.0
      %vm1323 = vcmp.ge.f32.partialorder %v1307, 0.0
      %vm1324 = vcmp.ge.f32.partialorder %v1308, 0.0
      %vm1325 = vcmp.ge.f32.partialorder %v1309, 0.0
      %v1326 = vmul.f32 %v1294, 0.01
      %v1327 = vmul.f32 %v1295, 0.01
      %v1328 = vmul.f32 %v1296, 0.01
      %v1329 = vmul.f32 %v1297, 0.01
      %v1330 = vmul.f32 %v1298, 0.01
      %v1331 = vmul.f32 %v1299, 0.01
      %v1332 = vmul.f32 %v1300, 0.01
      %v1333 = vmul.f32 %v1301, 0.01
      %v1334 = vmul.f32 %v1302, 0.01
      %v1335 = vmul.f32 %v1303, 0.01
      %v1336 = vmul.f32 %v1304, 0.01
      %v1337 = vmul.f32 %v1305, 0.01
      %v1338 = vmul.f32 %v1306, 0.01
      %v1339 = vmul.f32 %v1307, 0.01
      %v1340 = vmul.f32 %v1308, 0.01
      %v1341 = vmul.f32 %v1309, 0.01
      %v1342 = vsel %vm1310, %v1294, %v1326
      %v1343 = vsel %vm1311, %v1295, %v1327
      %v1344 = vsel %vm1312, %v1296, %v1328
      %v1345 = vsel %vm1313, %v1297, %v1329
      %v1346 = vsel %vm1314, %v1298, %v1330
      %v1347 = vsel %vm1315, %v1299, %v1331
      %v1348 = vsel %vm1316, %v1300, %v1332
      %v1349 = vsel %vm1317, %v1301, %v1333
      %v1350 = vsel %vm1318, %v1302, %v1334
      %v1351 = vsel %vm1319, %v1303, %v1335
      %v1352 = vsel %vm1320, %v1304, %v1336
      %v1353 = vsel %vm1321, %v1305, %v1337
      %v1354 = vsel %vm1322, %v1306, %v1338
      %v1355 = vsel %vm1323, %v1307, %v1339
      %v1356 = vsel %vm1324, %v1308, %v1340
      %v1357 = vsel %vm1325, %v1309, %v1341
      %1374 = vrot.lane.b32.xlu0 %v1342, 4
      %v1375 = vpop.permute.xlu0 %1374
      %1376 = vrot.lane.b32.xlu0 %v1343, 4
      %v1377 = vpop.permute.xlu0 %1376
      %1378 = vrot.lane.b32.xlu0 %v1344, 4
      %v1379 = vpop.permute.xlu0 %1378
      %1380 = vrot.lane.b32.xlu0 %v1345, 4
      %v1381 = vpop.permute.xlu0 %1380
      %1382 = vrot.lane.b32.xlu0 %v1346, 4
      %v1383 = vpop.permute.xlu0 %1382
      %1384 = vrot.lane.b32.xlu0 %v1347, 4
      %v1385 = vpop.permute.xlu0 %1384
      %1386 = vrot.lane.b32.xlu0 %v1348, 4
      %v1387 = vpop.permute.xlu0 %1386
      %1388 = vrot.lane.b32.xlu0 %v1349, 4
      %v1389 = vpop.permute.xlu0 %1388
      %1390 = vrot.lane.b32.xlu0 %v1350, 4
      %v1391 = vpop.permute.xlu0 %1390
      %1392 = vrot.lane.b32.xlu0 %v1351, 4
      %v1393 = vpop.permute.xlu0 %1392
      %1394 = vrot.lane.b32.xlu0 %v1352, 4
      %v1395 = vpop.permute.xlu0 %1394
      %1396 = vrot.lane.b32.xlu0 %v1353, 4
      %v1397 = vpop.permute.xlu0 %1396
      %1398 = vrot.lane.b32.xlu0 %v1354, 4
      %v1399 = vpop.permute.xlu0 %1398
      %1400 = vrot.lane.b32.xlu0 %v1355, 4
      %v1401 = vpop.permute.xlu0 %1400
      %1402 = vrot.lane.b32.xlu0 %v1356, 4
      %v1403 = vpop.permute.xlu0 %1402
      %1404 = vrot.lane.b32.xlu0 %v1357, 4
      %v1405 = vpop.permute.xlu0 %1404
      %v1422 = vadd.f32 %v228, %v1375
      %v1423 = vadd.f32 %v229, %v1377
      %v1424 = vadd.f32 %v230, %v1379
      %v1425 = vadd.f32 %v231, %v1381
      %v1426 = vadd.f32 %v232, %v1383
      %v1427 = vadd.f32 %v233, %v1385
      %v1428 = vadd.f32 %v234, %v1387
      %v1429 = vadd.f32 %v235, %v1389
      %v1430 = vadd.f32 %v236, %v1391
      %v1431 = vadd.f32 %v237, %v1393
      %v1432 = vadd.f32 %v238, %v1395
      %v1433 = vadd.f32 %v239, %v1397
      %v1434 = vadd.f32 %v240, %v1399
      %v1435 = vadd.f32 %v241, %v1401
      %v1436 = vadd.f32 %v242, %v1403
      %v1437 = vadd.f32 %v243, %v1405
      %v1438 = vxor.u32 %v1422, 2147483648
      %v1439 = vxor.u32 %v1423, 2147483648
      %v1440 = vxor.u32 %v1424, 2147483648
      %v1441 = vxor.u32 %v1425, 2147483648
      %v1442 = vxor.u32 %v1426, 2147483648
      %v1443 = vxor.u32 %v1427, 2147483648
      %v1444 = vxor.u32 %v1428, 2147483648
      %v1445 = vxor.u32 %v1429, 2147483648
      %v1446 = vxor.u32 %v1430, 2147483648
      %v1447 = vxor.u32 %v1431, 2147483648
      %v1448 = vxor.u32 %v1432, 2147483648
      %v1449 = vxor.u32 %v1433, 2147483648
      %v1450 = vxor.u32 %v1434, 2147483648
      %v1451 = vxor.u32 %v1435, 2147483648
      %v1452 = vxor.u32 %v1436, 2147483648
      %v1453 = vxor.u32 %v1437, 2147483648
      %v1454 = vmul.f32 %v1438, 1.442695
      %v1455 = vpow.pop %v1454
      %v1456 = vmul.f32 %v1439, 1.442695
      %v1457 = vpow.pop %v1456
      %v1458 = vmul.f32 %v1440, 1.442695
      %v1459 = vpow.pop %v1458
      %v1460 = vmul.f32 %v1441, 1.442695
      %v1461 = vpow.pop %v1460
      %v1462 = vmul.f32 %v1442, 1.442695
      %v1463 = vpow.pop %v1462
      %v1464 = vmul.f32 %v1443, 1.442695
      %v1465 = vpow.pop %v1464
      %v1466 = vmul.f32 %v1444, 1.442695
      %v1467 = vpow.pop %v1466
      %v1468 = vmul.f32 %v1445, 1.442695
      %v1469 = vpow.pop %v1468
      %v1470 = vmul.f32 %v1446, 1.442695
      %v1471 = vpow.pop %v1470
      %v1472 = vmul.f32 %v1447, 1.442695
      %v1473 = vpow.pop %v1472
      %v1474 = vmul.f32 %v1448, 1.442695
      %v1475 = vpow.pop %v1474
      %v1476 = vmul.f32 %v1449, 1.442695
      %v1477 = vpow.pop %v1476
      %v1478 = vmul.f32 %v1450, 1.442695
      %v1479 = vpow.pop %v1478
      %v1480 = vmul.f32 %v1451, 1.442695
      %v1481 = vpow.pop %v1480
      %v1482 = vmul.f32 %v1452, 1.442695
      %v1483 = vpow.pop %v1482
      %v1484 = vmul.f32 %v1453, 1.442695
      %v1485 = vpow.pop %v1484
      %v1486 = vadd.f32 %v1455, 1.0
      %v1487 = vadd.f32 %v1457, 1.0
      %v1488 = vadd.f32 %v1459, 1.0
      %v1489 = vadd.f32 %v1461, 1.0
      %v1490 = vadd.f32 %v1463, 1.0
      %v1491 = vadd.f32 %v1465, 1.0
      %v1492 = vadd.f32 %v1467, 1.0
      %v1493 = vadd.f32 %v1469, 1.0
      %v1494 = vadd.f32 %v1471, 1.0
      %v1495 = vadd.f32 %v1473, 1.0
      %v1496 = vadd.f32 %v1475, 1.0
      %v1497 = vadd.f32 %v1477, 1.0
      %v1498 = vadd.f32 %v1479, 1.0
      %v1499 = vadd.f32 %v1481, 1.0
      %v1500 = vadd.f32 %v1483, 1.0
      %v1501 = vadd.f32 %v1485, 1.0
      %v1502 = vrcp.pop %v1486
      %v1503 = vmul.f32 1.0, %v1502
      %v1504 = vrcp.pop %v1487
      %v1505 = vmul.f32 1.0, %v1504
      %v1506 = vrcp.pop %v1488
      %v1507 = vmul.f32 1.0, %v1506
      %v1508 = vrcp.pop %v1489
      %v1509 = vmul.f32 1.0, %v1508
      %v1510 = vrcp.pop %v1490
      %v1511 = vmul.f32 1.0, %v1510
      %v1512 = vrcp.pop %v1491
      %v1513 = vmul.f32 1.0, %v1512
      %v1514 = vrcp.pop %v1492
      %v1515 = vmul.f32 1.0, %v1514
      %v1516 = vrcp.pop %v1493
      %v1517 = vmul.f32 1.0, %v1516
      %v1518 = vrcp.pop %v1494
      %v1519 = vmul.f32 1.0, %v1518
      %v1520 = vrcp.pop %v1495
      %v1521 = vmul.f32 1.0, %v1520
      %v1522 = vrcp.pop %v1496
      %v1523 = vmul.f32 1.0, %v1522
      %v1524 = vrcp.pop %v1497
      %v1525 = vmul.f32 1.0, %v1524
      %v1526 = vrcp.pop %v1498
      %v1527 = vmul.f32 1.0, %v1526
      %v1528 = vrcp.pop %v1499
      %v1529 = vmul.f32 1.0, %v1528
      %v1530 = vrcp.pop %v1500
      %v1531 = vmul.f32 1.0, %v1530
      %v1532 = vrcp.pop %v1501
      %v1533 = vmul.f32 1.0, %v1532
      %1550 = vrot.lane.b32.xlu0 %v1503, 124
      %v1551 = vpop.permute.xlu0 %1550
      %1552 = vrot.lane.b32.xlu0 %v1505, 124
      %v1553 = vpop.permute.xlu0 %1552
      %1554 = vrot.lane.b32.xlu0 %v1507, 124
      %v1555 = vpop.permute.xlu0 %1554
      %1556 = vrot.lane.b32.xlu0 %v1509, 124
      %v1557 = vpop.permute.xlu0 %1556
      %1558 = vrot.lane.b32.xlu0 %v1511, 124
      %v1559 = vpop.permute.xlu0 %1558
      %1560 = vrot.lane.b32.xlu0 %v1513, 124
      %v1561 = vpop.permute.xlu0 %1560
      %1562 = vrot.lane.b32.xlu0 %v1515, 124
      %v1563 = vpop.permute.xlu0 %1562
      %1564 = vrot.lane.b32.xlu0 %v1517, 124
      %v1565 = vpop.permute.xlu0 %1564
      %1566 = vrot.lane.b32.xlu0 %v1519, 124
      %v1567 = vpop.permute.xlu0 %1566
      %1568 = vrot.lane.b32.xlu0 %v1521, 124
      %v1569 = vpop.permute.xlu0 %1568
      %1570 = vrot.lane.b32.xlu0 %v1523, 124
      %v1571 = vpop.permute.xlu0 %1570
      %1572 = vrot.lane.b32.xlu0 %v1525, 124
      %v1573 = vpop.permute.xlu0 %1572
      %1574 = vrot.lane.b32.xlu0 %v1527, 124
      %v1575 = vpop.permute.xlu0 %1574
      %1576 = vrot.lane.b32.xlu0 %v1529, 124
      %v1577 = vpop.permute.xlu0 %1576
      %1578 = vrot.lane.b32.xlu0 %v1531, 124
      %v1579 = vpop.permute.xlu0 %1578
      %1580 = vrot.lane.b32.xlu0 %v1533, 124
      %v1581 = vpop.permute.xlu0 %1580
      %vm1598 = vcmask 23552
      %1599 = vst.msk [vmem:[%s226] sm:$0xff] %vm1598, %v1551
      %1600 = vst.msk [vmem:[%s226 + $0x8] sm:$0xff] %vm1598, %v1553
      %1601 = vst.msk [vmem:[%s226 + $0x10] sm:$0xff] %vm1598, %v1555
      %1602 = vst.msk [vmem:[%s226 + $0x18] sm:$0xff] %vm1598, %v1557
      %1603 = vst.msk [vmem:[%s226 + $0x20] sm:$0xff] %vm1598, %v1559
      %1604 = vst.msk [vmem:[%s226 + $0x28] sm:$0xff] %vm1598, %v1561
      %1605 = vst.msk [vmem:[%s226 + $0x30] sm:$0xff] %vm1598, %v1563
      %1606 = vst.msk [vmem:[%s226 + $0x38] sm:$0xff] %vm1598, %v1565
      %1607 = vst.msk [vmem:[%s226 + $0x40] sm:$0xff] %vm1598, %v1567
      %1608 = vst.msk [vmem:[%s226 + $0x48] sm:$0xff] %vm1598, %v1569
      %1609 = vst.msk [vmem:[%s226 + $0x50] sm:$0xff] %vm1598, %v1571
      %1610 = vst.msk [vmem:[%s226 + $0x58] sm:$0xff] %vm1598, %v1573
      %1611 = vst.msk [vmem:[%s226 + $0x60] sm:$0xff] %vm1598, %v1575
      %1612 = vst.msk [vmem:[%s226 + $0x68] sm:$0xff] %vm1598, %v1577
      %1613 = vst.msk [vmem:[%s226 + $0x70] sm:$0xff] %vm1598, %v1579
      %1614 = vst.msk [vmem:[%s226 + $0x78] sm:$0xff] %vm1598, %v1581
      %s1615 = smul.u32 16, %s16
      %p1616 = scmp.lt.s32.totalorder %s1615, 47
      %s1617 = scalar_select %p1616, %s1615, 47
      %s1618 = smul.addr %s1617, 8
      %s1619 = scalar_lea.vmem %s5, %s1618
      // Predicated region
      $region41: #{color_decoder.1} parent=39 // pred_check
        %p1620 = pneg %p144
      $region42: #{color_decoder.1} parent=39 // pred_check_branch
        %1622 = sbr.rel (%p1620) target = $region44
      $region43: #{color_decoder.1} parent=39 // pred_region
        %s1623 = smul.u32 16, %s16
      $region44: #{color_decoder.1} parent=39 // pred_fallthru
        _
    $region40: #{color_decoder.1} parent=5 // pred_fallthru
      _
    %p1624 = scmp.le.s32.totalorder 2, %s11
    // Predicated region
    $region45: #{color_decoder.1} parent=5 // pred_check
      %p1625 = pneg %p1624
    $region46: #{color_decoder.1} parent=5 // pred_check_branch
      %1627 = sbr.rel (%p1625) target = $region48
    $region47: #{color_decoder.1} parent=5 // pred_region
      %s1628 = ssub.s32 %s11, 2
      // Predicated region
      $region49: #{color_decoder.1} parent=47 // pred_check
        %p1629 = pneg %p150
      $region50: #{color_decoder.1} parent=47 // pred_check_branch
        %1631 = sbr.rel (%p1629) target = $region52
      $region51: #{color_decoder.1} parent=47 // pred_region
        %s1632 = smul.u32 16, %s17
        %p1633 = scmp.lt.s32.totalorder %s1632, 47
        %s1634 = scalar_select %p1633, %s1632, 47
        %s1635 = smul.addr %s1634, 8
        %s1636 = scalar_lea.vmem %s5, %s1635
      $region52: #{color_decoder.1} parent=47 // pred_fallthru
        _
    $region48: #{color_decoder.1} parent=5 // pred_fallthru
      _
  $region6: #{color_decoder.1} parent=0 // loop_footer
    %s15 = sadd.s32 1, %s11
  $region7: #{color_decoder.1} parent=0 // loop_footer_branch
    %10 = sbr.rel target = $region3
  $region8: #{color_decoder.1} parent=0 // loop_exit
    _

</llo_original>
